<compile_context>
chip_gen: v5e
topology: v5e:2x2
jax: 0.10.0
libtpu: 0.0.40
codegen_flags: <defaults>
</compile_context>

<pallas_src>
import functools

import jax
import jax.numpy as jnp
from jax.experimental import pallas as pl
from jax.experimental.pallas import tpu as pltpu


# ----------------------------- small config ---------------------------------
class SmallConfig:
    vocab_size = 100
    max_position_embeddings = 32
    hidden_size = 32
    num_layers = 2
    num_heads = 4
    intermediate_size = 64
    layer_norm_epsilon = 1e-5


# ------------------------------ helpers --------------------------------------
def _np_layer_norm(x, w, b):
    # matches the numpy reference layer_norm: (x - mean) / (std + 1e-5) * w + b
    mean = jnp.mean(x, axis=-1, keepdims=True)
    std = jnp.sqrt(jnp.mean((x - mean) ** 2, axis=-1, keepdims=True))
    return (x - mean) / (std + 1e-5) * w + b


def _gelu_tanh(x):
    # reference gelu; x*x*x instead of x**3 keeps it on the VPU
    return 0.5 * x * (1.0 + jnp.tanh(0.797885 * (x + 0.044715 * x * x * x)))


# ------------------------------ fused kernel ----------------------------------
def gptneo_kernel(x_ref, bias_ref, wqkv_ref, wo_ref, wfc_ref, wpj_ref,
                  vecs_ref, bfc_ref, lnf_ref, out_ref,
                  *, num_layers, num_heads, eps):
    nh = num_heads
    x = x_ref[...]                       # (T, H) hidden slab, stays in vregs
    bias = bias_ref[...]                 # (T, T) combined additive mask bias
    T, H = x.shape

    for l in range(num_layers):          # weights fully VMEM-resident, L tiny
        vec = vecs_ref[l]                # (6, H) packed per-layer vectors
        ln1w, ln1b, ob = vec[0:1], vec[1:2], vec[2:3]
        ln2w, ln2b, bpj = vec[3:4], vec[4:5], vec[5:6]
        bfc = bfc_ref[l]                 # (1, I)

        # --- LayerNorm 1 (numpy-style: divide by (std + eps)) ---
        x_ln1 = _np_layer_norm(x, ln1w, ln1b)

        # --- batched per-head QKV projection -> (3*NH, T, HD), no lane slices
        xb = jnp.broadcast_to(x_ln1[None], (3 * nh, T, H))
        qkv = jnp.einsum("nth,ndh->ntd", xb, wqkv_ref[l],
                         preferred_element_type=jnp.float32)
        q, k, v = qkv[0:nh], qkv[nh:2 * nh], qkv[2 * nh:3 * nh]

        # --- attention over all T tokens (cross-batch pairs masked by bias),
        #     NO 1/sqrt(d) scaling, matching the reference ---
        s = jnp.einsum("ntd,nsd->nts", q, k,
                       preferred_element_type=jnp.float32)       # (NH, T, T)
        s = s + bias[None]
        s = s - jnp.max(s, axis=-1, keepdims=True)
        e = jnp.exp(s)
        p = e / jnp.sum(e, axis=-1, keepdims=True)
        ctx = jnp.einsum("nts,nsd->ntd", p, v,
                         preferred_element_type=jnp.float32)     # (NH, T, HD)

        # --- output projection: per-head partials summed over heads ---
        parts = jnp.einsum("ntd,ndj->ntj", ctx, wo_ref[l],
                           preferred_element_type=jnp.float32)   # (NH, T, H)
        attn_out = jnp.sum(parts, axis=0) + ob

        # --- residual + LayerNorm 2 + MLP (tanh GELU) + residual ---
        x = x + attn_out
        x_ln2 = _np_layer_norm(x, ln2w, ln2b)
        h1 = jnp.dot(x_ln2, wfc_ref[l],
                     preferred_element_type=jnp.float32) + bfc   # (T, I)
        h2 = jnp.dot(_gelu_tanh(h1), wpj_ref[l],
                     preferred_element_type=jnp.float32) + bpj   # (T, H)
        x = x + h2

    # --- final torch-style LayerNorm: (x - mean) / sqrt(var + eps) ---
    mean = jnp.mean(x, axis=-1, keepdims=True)
    var = jnp.mean((x - mean) ** 2, axis=-1, keepdims=True)
    out_ref[...] = (x - mean) / jnp.sqrt(var + eps) * lnf_ref[0:1] + lnf_ref[1:2]


# ------------------------------ wrappers --------------------------------------
def gptneo_forward(input_ids, attention_mask, params, config):
    wte, wpe, stacked, lnf = params
    B, S = input_ids.shape
    H = config.hidden_size
    T = B * S

    # embedding gathers (data-dependent gather stays in plain JAX glue)
    hidden = jnp.take(wte, input_ids, axis=0) + wpe[jnp.arange(S)][None]
    hidden = hidden.reshape(T, H).astype(jnp.float32)

    # combined (same-batch & causal & key-padding) additive bias over the
    # flattened (B*S) tokens; -1e9 (not finfo.min) avoids -inf/NaN in softmax
    bids = jnp.repeat(jnp.arange(B), S)
    pos = jnp.tile(jnp.arange(S), B)
    allowed = ((bids[:, None] == bids[None, :])
               & (pos[:, None] >= pos[None, :])
               & attention_mask.reshape(T).astype(bool)[None, :])
    bias = jnp.where(allowed, 0.0, -1e9).astype(jnp.float32)

    vmem = pl.BlockSpec(memory_space=pltpu.MemorySpace.VMEM)
    kernel = functools.partial(
        gptneo_kernel, num_layers=config.num_layers,
        num_heads=config.num_heads, eps=config.layer_norm_epsilon)

    out = pl.pallas_call(
        kernel,
        out_shape=jax.ShapeDtypeStruct((T, H), jnp.float32),
        in_specs=[vmem] * 9,
        out_specs=vmem,
    )(hidden, bias,
      stacked["wqkv3"], stacked["wo3"], stacked["wfc_t"], stacked["wpj_t"],
      stacked["vecs"], stacked["bfc"], lnf)
    return out.reshape(B, S, H)


def reference_forward(input_ids, attention_mask, params, config):
    """Pure-JAX reference mirroring the torch/numpy module (validation only)."""
    wte, wpe, st, lnf = params
    B, S = input_ids.shape
    NH, L = config.num_heads, config.num_layers
    x = (jnp.take(wte, input_ids, axis=0) + wpe[jnp.arange(S)][None]
         ).astype(jnp.float32)                                   # (B, S, H)
    causal = jnp.tril(jnp.ones((S, S), dtype=bool))
    keep = causal[None, None] & attention_mask.astype(bool)[:, None, None, :]
    for l in range(L):
        v6 = st["vecs"][l]
        xn = _np_layer_norm(x, v6[0], v6[1])
        q = jnp.einsum("bsh,ndh->bnsd", xn, st["wqkv3"][l, 0:NH])
        k = jnp.einsum("bsh,ndh->bnsd", xn, st["wqkv3"][l, NH:2 * NH])
        v = jnp.einsum("bsh,ndh->bnsd", xn, st["wqkv3"][l, 2 * NH:])
        s = jnp.where(keep, jnp.einsum("bnqd,bnkd->bnqk", q, k), -1e9)
        p = jax.nn.softmax(s, axis=-1)
        ctx = jnp.einsum("bnqk,bnkd->bnqd", p, v)
        x = x + jnp.einsum("bnqd,ndj->bqj", ctx, st["wo3"][l]) + v6[2]
        xn2 = _np_layer_norm(x, v6[3], v6[4])
        h1 = xn2 @ st["wfc_t"][l] + st["bfc"][l, 0]
        x = x + _gelu_tanh(h1) @ st["wpj_t"][l] + v6[5]
    mean = x.mean(-1, keepdims=True)
    var = ((x - mean) ** 2).mean(-1, keepdims=True)
    return ((x - mean) / jnp.sqrt(var + config.layer_norm_epsilon)
            * lnf[0] + lnf[1])


def init_params(config, key):
    H, I, L = config.hidden_size, config.intermediate_size, config.num_layers
    NH = config.num_heads
    HD = H // NH
    k_emb, k_blocks = jax.random.split(key)
    k_wte, k_wpe = jax.random.split(k_emb)
    wte = 0.02 * jax.random.normal(k_wte, (config.vocab_size, H), jnp.float32)
    wpe = 0.02 * jax.random.normal(
        k_wpe, (config.max_position_embeddings, H), jnp.float32)

    layer_keys = jax.random.split(k_blocks, L)
    wqkv3, wo3, wfc_t, wpj_t, vecs, bfc = [], [], [], [], [], []
    for l in range(L):
        kq, kk, kv, ko, kf, kp = jax.random.split(layer_keys[l], 6)
        qw = 0.02 * jax.random.normal(kq, (H, H), jnp.float32)
        kw = 0.02 * jax.random.normal(kk, (H, H), jnp.float32)
        vw = 0.02 * jax.random.normal(kv, (H, H), jnp.float32)
        ow = 0.02 * jax.random.normal(ko, (H, H), jnp.float32)
        fcw = 0.02 * jax.random.normal(kf, (I, H), jnp.float32)
        pjw = 0.02 * jax.random.normal(kp, (H, I), jnp.float32)
        # per-head layouts, pre-transposed on the host (no in-kernel transpose)
        wqkv3.append(jnp.concatenate([qw.reshape(NH, HD, H),
                                      kw.reshape(NH, HD, H),
                                      vw.reshape(NH, HD, H)], axis=0))
        wo3.append(ow.T.reshape(NH, HD, H))
        wfc_t.append(fcw.T)                                   # (H, I)
        wpj_t.append(pjw.T)                                   # (I, H)
        vecs.append(jnp.stack([jnp.ones(H), jnp.zeros(H), jnp.zeros(H),
                               jnp.ones(H), jnp.zeros(H), jnp.zeros(H)]
                              ).astype(jnp.float32))          # ln1w,ln1b,ob,ln2w,ln2b,bpj
        bfc.append(jnp.zeros((1, I), jnp.float32))
    stacked = {
        "wqkv3": jnp.stack(wqkv3),    # (L, 3*NH, HD, H)
        "wo3": jnp.stack(wo3),        # (L, NH, HD, H)
        "wfc_t": jnp.stack(wfc_t),    # (L, H, I)
        "wpj_t": jnp.stack(wpj_t),    # (L, I, H)
        "vecs": jnp.stack(vecs),      # (L, 6, H)
        "bfc": jnp.stack(bfc),        # (L, 1, I)
    }
    lnf = jnp.stack([jnp.ones(H, jnp.float32), jnp.zeros(H, jnp.float32)])
    return wte, wpe, stacked, lnf


if __name__ == "__main__":
    config = SmallConfig()
    key = jax.random.PRNGKey(0)
    k_param, k_ids = jax.random.split(key)

    B, S = 2, 8
    input_ids = jax.random.randint(k_ids, (B, S), 0, config.vocab_size,
                                   dtype=jnp.int32)
    attention_mask = jnp.ones_like(input_ids)   # torch.ones_like(inputs)

    params = init_params(config, k_param)

    fwd = jax.jit(functools.partial(gptneo_forward, config=config))
    out = jax.block_until_ready(fwd(input_ids, attention_mask, params))

    ref = reference_forward(input_ids, attention_mask, params, config)
    assert out.shape == (B, S, config.hidden_size)
    assert bool(jnp.all(jnp.isfinite(out)))
    assert bool(jnp.allclose(out, ref, atol=3e-2, rtol=3e-2))
    print("KERNEL_OK")
</pallas_src>

<mosaic_0001>
module attributes {stable_mosaic.version = 11 : i64} {
  func.func @gptneo_kernel(%arg0: memref<16x32xf32, #tpu.memory_space<vmem>>, %arg1: memref<16x16xf32, #tpu.memory_space<vmem>>, %arg2: memref<2x12x8x32xf32, #tpu.memory_space<vmem>>, %arg3: memref<2x4x8x32xf32, #tpu.memory_space<vmem>>, %arg4: memref<2x32x64xf32, #tpu.memory_space<vmem>>, %arg5: memref<2x64x32xf32, #tpu.memory_space<vmem>>, %arg6: memref<2x6x32xf32, #tpu.memory_space<vmem>>, %arg7: memref<2x1x64xf32, #tpu.memory_space<vmem>>, %arg8: memref<2x32xf32, #tpu.memory_space<vmem>>, %arg9: memref<16x32xf32, #tpu.memory_space<vmem>>) attributes {dimension_semantics = [], scalar_prefetch = 0 : i64, scratch_operands = 0 : i64, tpu.core_type = #tpu.core_type<tc>} {
    %c0 = arith.constant 0 : index
    %c0_0 = arith.constant 0 : index
    %0 = vector.load %arg0[%c0, %c0_0] : memref<16x32xf32, #tpu.memory_space<vmem>>, vector<16x32xf32>
    %c0_1 = arith.constant 0 : index
    %c0_2 = arith.constant 0 : index
    %1 = vector.load %arg1[%c0_1, %c0_2] : memref<16x16xf32, #tpu.memory_space<vmem>>, vector<16x16xf32>
    %c0_3 = arith.constant 0 : index
    %c0_4 = arith.constant 0 : index
    %c0_5 = arith.constant 0 : index
    %2 = vector.load %arg6[%c0_3, %c0_4, %c0_5] : memref<2x6x32xf32, #tpu.memory_space<vmem>>, vector<1x6x32xf32>
    %3 = vector.shape_cast %2 : vector<1x6x32xf32> to vector<6x32xf32>
    %4 = vector.extract_strided_slice %3 {offsets = [0, 0], sizes = [1, 32], strides = [1, 1]} : vector<6x32xf32> to vector<1x32xf32>
    %5 = vector.extract_strided_slice %3 {offsets = [1, 0], sizes = [1, 32], strides = [1, 1]} : vector<6x32xf32> to vector<1x32xf32>
    %6 = vector.extract_strided_slice %3 {offsets = [2, 0], sizes = [1, 32], strides = [1, 1]} : vector<6x32xf32> to vector<1x32xf32>
    %7 = vector.extract_strided_slice %3 {offsets = [3, 0], sizes = [1, 32], strides = [1, 1]} : vector<6x32xf32> to vector<1x32xf32>
    %8 = vector.extract_strided_slice %3 {offsets = [4, 0], sizes = [1, 32], strides = [1, 1]} : vector<6x32xf32> to vector<1x32xf32>
    %9 = vector.extract_strided_slice %3 {offsets = [5, 0], sizes = [1, 32], strides = [1, 1]} : vector<6x32xf32> to vector<1x32xf32>
    %c0_6 = arith.constant 0 : index
    %c0_7 = arith.constant 0 : index
    %c0_8 = arith.constant 0 : index
    %10 = vector.load %arg7[%c0_6, %c0_7, %c0_8] : memref<2x1x64xf32, #tpu.memory_space<vmem>>, vector<1x1x64xf32>
    %11 = vector.shape_cast %10 : vector<1x1x64xf32> to vector<1x64xf32>
    %cst = arith.constant dense<0.000000e+00> : vector<16xf32>
    %12 = vector.multi_reduction <add>, %0, %cst [1] : vector<16x32xf32> to vector<16xf32>
    %13 = vector.shape_cast %12 : vector<16xf32> to vector<16x1xf32>
    %cst_9 = arith.constant 3.200000e+01 : f32
    %14 = vector.broadcast %cst_9 : f32 to vector<16x1xf32>
    %15 = arith.divf %13, %14 : vector<16x1xf32>
    %16 = vector.broadcast %15 : vector<16x1xf32> to vector<16x32xf32>
    %17 = arith.subf %0, %16 : vector<16x32xf32>
    %18 = arith.mulf %17, %17 : vector<16x32xf32>
    %cst_10 = arith.constant dense<0.000000e+00> : vector<16xf32>
    %19 = vector.multi_reduction <add>, %18, %cst_10 [1] : vector<16x32xf32> to vector<16xf32>
    %20 = vector.shape_cast %19 : vector<16xf32> to vector<16x1xf32>
    %cst_11 = arith.constant 3.200000e+01 : f32
    %21 = vector.broadcast %cst_11 : f32 to vector<16x1xf32>
    %22 = arith.divf %20, %21 : vector<16x1xf32>
    %23 = math.sqrt %22 : vector<16x1xf32>
    %24 = vector.broadcast %15 : vector<16x1xf32> to vector<16x32xf32>
    %25 = arith.subf %0, %24 : vector<16x32xf32>
    %cst_12 = arith.constant 9.99999974E-6 : f32
    %26 = vector.broadcast %cst_12 : f32 to vector<16x1xf32>
    %27 = arith.addf %23, %26 : vector<16x1xf32>
    %28 = vector.broadcast %27 : vector<16x1xf32> to vector<16x32xf32>
    %29 = arith.divf %25, %28 : vector<16x32xf32>
    %30 = vector.broadcast %4 : vector<1x32xf32> to vector<16x32xf32>
    %31 = arith.mulf %29, %30 : vector<16x32xf32>
    %32 = vector.broadcast %5 : vector<1x32xf32> to vector<16x32xf32>
    %33 = arith.addf %31, %32 : vector<16x32xf32>
    %34 = vector.shape_cast %33 : vector<16x32xf32> to vector<1x16x32xf32>
    %35 = vector.shape_cast %34 : vector<1x16x32xf32> to vector<1x16x32xf32>
    %36 = vector.broadcast %35 : vector<1x16x32xf32> to vector<12x16x32xf32>
    %c0_13 = arith.constant 0 : index
    %c0_14 = arith.constant 0 : index
    %c0_15 = arith.constant 0 : index
    %c0_16 = arith.constant 0 : index
    %37 = vector.load %arg2[%c0_13, %c0_14, %c0_15, %c0_16] : memref<2x12x8x32xf32, #tpu.memory_space<vmem>>, vector<1x12x8x32xf32>
    %38 = vector.shape_cast %37 : vector<1x12x8x32xf32> to vector<12x8x32xf32>
    "tpu.trace_start"() <{level = 10 : i32, message = "nth,ndh->ntd"}> : () -> ()
    %cst_17 = arith.constant dense<0.000000e+00> : vector<12x16x8xf32>
    %39 = tpu.matmul %36, %38, %cst_17 {dimension_numbers = #tpu.dot_dimension_numbers<[2], [2], [1], [1], [0, 0, 0, 1, 1, 1], [0], [0]>} : vector<12x16x32xf32>, vector<12x8x32xf32>, vector<12x16x8xf32> -> vector<12x16x8xf32>
    "tpu.trace_stop"() : () -> ()
    %40 = vector.extract_strided_slice %39 {offsets = [0, 0, 0], sizes = [4, 16, 8], strides = [1, 1, 1]} : vector<12x16x8xf32> to vector<4x16x8xf32>
    %41 = vector.extract_strided_slice %39 {offsets = [4, 0, 0], sizes = [4, 16, 8], strides = [1, 1, 1]} : vector<12x16x8xf32> to vector<4x16x8xf32>
    %42 = vector.extract_strided_slice %39 {offsets = [8, 0, 0], sizes = [4, 16, 8], strides = [1, 1, 1]} : vector<12x16x8xf32> to vector<4x16x8xf32>
    "tpu.trace_start"() <{level = 10 : i32, message = "ntd,nsd->nts"}> : () -> ()
    %cst_18 = arith.constant dense<0.000000e+00> : vector<4x16x16xf32>
    %43 = tpu.matmul %40, %41, %cst_18 {dimension_numbers = #tpu.dot_dimension_numbers<[2], [2], [1], [1], [0, 0, 0, 1, 1, 1], [0], [0]>} : vector<4x16x8xf32>, vector<4x16x8xf32>, vector<4x16x16xf32> -> vector<4x16x16xf32>
    "tpu.trace_stop"() : () -> ()
    %44 = vector.shape_cast %1 : vector<16x16xf32> to vector<1x16x16xf32>
    %45 = vector.broadcast %44 : vector<1x16x16xf32> to vector<4x16x16xf32>
    %46 = arith.addf %43, %45 : vector<4x16x16xf32>
    %cst_19 = arith.constant dense<0xFF800000> : vector<4x16xf32>
    %47 = vector.multi_reduction <maximumf>, %46, %cst_19 [2] : vector<4x16x16xf32> to vector<4x16xf32>
    %48 = vector.shape_cast %47 : vector<4x16xf32> to vector<4x16x1xf32>
    %49 = vector.broadcast %48 : vector<4x16x1xf32> to vector<4x16x16xf32>
    %50 = arith.subf %46, %49 : vector<4x16x16xf32>
    %51 = math.exp %50 : vector<4x16x16xf32>
    %cst_20 = arith.constant dense<0.000000e+00> : vector<4x16xf32>
    %52 = vector.multi_reduction <add>, %51, %cst_20 [2] : vector<4x16x16xf32> to vector<4x16xf32>
    %53 = vector.shape_cast %52 : vector<4x16xf32> to vector<4x16x1xf32>
    %54 = vector.broadcast %53 : vector<4x16x1xf32> to vector<4x16x16xf32>
    %55 = arith.divf %51, %54 : vector<4x16x16xf32>
    "tpu.trace_start"() <{level = 10 : i32, message = "nts,nsd->ntd"}> : () -> ()
    %cst_21 = arith.constant dense<0.000000e+00> : vector<4x16x8xf32>
    %56 = tpu.matmul %55, %42, %cst_21 {dimension_numbers = #tpu.dot_dimension_numbers<[2], [1], [1], [2], [0, 0, 0, 1, 1, 2], [0], [0]>} : vector<4x16x16xf32>, vector<4x16x8xf32>, vector<4x16x8xf32> -> vector<4x16x8xf32>
    "tpu.trace_stop"() : () -> ()
    %c0_22 = arith.constant 0 : index
    %c0_23 = arith.constant 0 : index
    %c0_24 = arith.constant 0 : index
    %c0_25 = arith.constant 0 : index
    %57 = vector.load %arg3[%c0_22, %c0_23, %c0_24, %c0_25] : memref<2x4x8x32xf32, #tpu.memory_space<vmem>>, vector<1x4x8x32xf32>
    %58 = vector.shape_cast %57 : vector<1x4x8x32xf32> to vector<4x8x32xf32>
    "tpu.trace_start"() <{level = 10 : i32, message = "ntd,ndj->ntj"}> : () -> ()
    %cst_26 = arith.constant dense<0.000000e+00> : vector<4x16x32xf32>
    %59 = tpu.matmul %56, %58, %cst_26 {dimension_numbers = #tpu.dot_dimension_numbers<[2], [1], [1], [2], [0, 0, 0, 1, 1, 2], [0], [0]>} : vector<4x16x8xf32>, vector<4x8x32xf32>, vector<4x16x32xf32> -> vector<4x16x32xf32>
    "tpu.trace_stop"() : () -> ()
    %cst_27 = arith.constant dense<0.000000e+00> : vector<16x32xf32>
    %60 = vector.multi_reduction <add>, %59, %cst_27 [0] : vector<4x16x32xf32> to vector<16x32xf32>
    %61 = vector.broadcast %6 : vector<1x32xf32> to vector<16x32xf32>
    %62 = arith.addf %60, %61 : vector<16x32xf32>
    %63 = arith.addf %0, %62 : vector<16x32xf32>
    %cst_28 = arith.constant dense<0.000000e+00> : vector<16xf32>
    %64 = vector.multi_reduction <add>, %63, %cst_28 [1] : vector<16x32xf32> to vector<16xf32>
    %65 = vector.shape_cast %64 : vector<16xf32> to vector<16x1xf32>
    %cst_29 = arith.constant 3.200000e+01 : f32
    %66 = vector.broadcast %cst_29 : f32 to vector<16x1xf32>
    %67 = arith.divf %65, %66 : vector<16x1xf32>
    %68 = vector.broadcast %67 : vector<16x1xf32> to vector<16x32xf32>
    %69 = arith.subf %63, %68 : vector<16x32xf32>
    %70 = arith.mulf %69, %69 : vector<16x32xf32>
    %cst_30 = arith.constant dense<0.000000e+00> : vector<16xf32>
    %71 = vector.multi_reduction <add>, %70, %cst_30 [1] : vector<16x32xf32> to vector<16xf32>
    %72 = vector.shape_cast %71 : vector<16xf32> to vector<16x1xf32>
    %cst_31 = arith.constant 3.200000e+01 : f32
    %73 = vector.broadcast %cst_31 : f32 to vector<16x1xf32>
    %74 = arith.divf %72, %73 : vector<16x1xf32>
    %75 = math.sqrt %74 : vector<16x1xf32>
    %76 = vector.broadcast %67 : vector<16x1xf32> to vector<16x32xf32>
    %77 = arith.subf %63, %76 : vector<16x32xf32>
    %cst_32 = arith.constant 9.99999974E-6 : f32
    %78 = vector.broadcast %cst_32 : f32 to vector<16x1xf32>
    %79 = arith.addf %75, %78 : vector<16x1xf32>
    %80 = vector.broadcast %79 : vector<16x1xf32> to vector<16x32xf32>
    %81 = arith.divf %77, %80 : vector<16x32xf32>
    %82 = vector.broadcast %7 : vector<1x32xf32> to vector<16x32xf32>
    %83 = arith.mulf %81, %82 : vector<16x32xf32>
    %84 = vector.broadcast %8 : vector<1x32xf32> to vector<16x32xf32>
    %85 = arith.addf %83, %84 : vector<16x32xf32>
    %c0_33 = arith.constant 0 : index
    %c0_34 = arith.constant 0 : index
    %c0_35 = arith.constant 0 : index
    %86 = vector.load %arg4[%c0_33, %c0_34, %c0_35] : memref<2x32x64xf32, #tpu.memory_space<vmem>>, vector<1x32x64xf32>
    %87 = vector.shape_cast %86 : vector<1x32x64xf32> to vector<32x64xf32>
    %cst_36 = arith.constant dense<0.000000e+00> : vector<16x64xf32>
    %88 = tpu.matmul %85, %87, %cst_36 {dimension_numbers = #tpu.dot_dimension_numbers<[1], [0], [0], [1], [0, 0, 1, 1], [], []>} : vector<16x32xf32>, vector<32x64xf32>, vector<16x64xf32> -> vector<16x64xf32>
    %89 = vector.broadcast %11 : vector<1x64xf32> to vector<16x64xf32>
    %90 = arith.addf %88, %89 : vector<16x64xf32>
    %cst_37 = arith.constant 5.000000e-01 : f32
    %91 = vector.broadcast %cst_37 : f32 to vector<16x64xf32>
    %92 = arith.mulf %91, %90 : vector<16x64xf32>
    %cst_38 = arith.constant 4.471500e-02 : f32
    %93 = vector.broadcast %cst_38 : f32 to vector<16x64xf32>
    %94 = arith.mulf %93, %90 : vector<16x64xf32>
    %95 = arith.mulf %94, %90 : vector<16x64xf32>
    %96 = arith.mulf %95, %90 : vector<16x64xf32>
    %97 = arith.addf %90, %96 : vector<16x64xf32>
    %cst_39 = arith.constant 7.978850e-01 : f32
    %98 = vector.broadcast %cst_39 : f32 to vector<16x64xf32>
    %99 = arith.mulf %98, %97 : vector<16x64xf32>
    %100 = math.tanh %99 : vector<16x64xf32>
    %cst_40 = arith.constant 1.000000e+00 : f32
    %101 = vector.broadcast %cst_40 : f32 to vector<16x64xf32>
    %102 = arith.addf %101, %100 : vector<16x64xf32>
    %103 = arith.mulf %92, %102 : vector<16x64xf32>
    %c0_41 = arith.constant 0 : index
    %c0_42 = arith.constant 0 : index
    %c0_43 = arith.constant 0 : index
    %104 = vector.load %arg5[%c0_41, %c0_42, %c0_43] : memref<2x64x32xf32, #tpu.memory_space<vmem>>, vector<1x64x32xf32>
    %105 = vector.shape_cast %104 : vector<1x64x32xf32> to vector<64x32xf32>
    %cst_44 = arith.constant dense<0.000000e+00> : vector<16x32xf32>
    %106 = tpu.matmul %103, %105, %cst_44 {dimension_numbers = #tpu.dot_dimension_numbers<[1], [0], [0], [1], [0, 0, 1, 1], [], []>} : vector<16x64xf32>, vector<64x32xf32>, vector<16x32xf32> -> vector<16x32xf32>
    %107 = vector.broadcast %9 : vector<1x32xf32> to vector<16x32xf32>
    %108 = arith.addf %106, %107 : vector<16x32xf32>
    %109 = arith.addf %63, %108 : vector<16x32xf32>
    %c1 = arith.constant 1 : index
    %c0_45 = arith.constant 0 : index
    %c0_46 = arith.constant 0 : index
    %110 = vector.load %arg6[%c1, %c0_45, %c0_46] : memref<2x6x32xf32, #tpu.memory_space<vmem>>, vector<1x6x32xf32>
    %111 = vector.shape_cast %110 : vector<1x6x32xf32> to vector<6x32xf32>
    %112 = vector.extract_strided_slice %111 {offsets = [0, 0], sizes = [1, 32], strides = [1, 1]} : vector<6x32xf32> to vector<1x32xf32>
    %113 = vector.extract_strided_slice %111 {offsets = [1, 0], sizes = [1, 32], strides = [1, 1]} : vector<6x32xf32> to vector<1x32xf32>
    %114 = vector.extract_strided_slice %111 {offsets = [2, 0], sizes = [1, 32], strides = [1, 1]} : vector<6x32xf32> to vector<1x32xf32>
    %115 = vector.extract_strided_slice %111 {offsets = [3, 0], sizes = [1, 32], strides = [1, 1]} : vector<6x32xf32> to vector<1x32xf32>
    %116 = vector.extract_strided_slice %111 {offsets = [4, 0], sizes = [1, 32], strides = [1, 1]} : vector<6x32xf32> to vector<1x32xf32>
    %117 = vector.extract_strided_slice %111 {offsets = [5, 0], sizes = [1, 32], strides = [1, 1]} : vector<6x32xf32> to vector<1x32xf32>
    %c1_47 = arith.constant 1 : index
    %c0_48 = arith.constant 0 : index
    %c0_49 = arith.constant 0 : index
    %118 = vector.load %arg7[%c1_47, %c0_48, %c0_49] : memref<2x1x64xf32, #tpu.memory_space<vmem>>, vector<1x1x64xf32>
    %119 = vector.shape_cast %118 : vector<1x1x64xf32> to vector<1x64xf32>
    %cst_50 = arith.constant dense<0.000000e+00> : vector<16xf32>
    %120 = vector.multi_reduction <add>, %109, %cst_50 [1] : vector<16x32xf32> to vector<16xf32>
    %121 = vector.shape_cast %120 : vector<16xf32> to vector<16x1xf32>
    %cst_51 = arith.constant 3.200000e+01 : f32
    %122 = vector.broadcast %cst_51 : f32 to vector<16x1xf32>
    %123 = arith.divf %121, %122 : vector<16x1xf32>
    %124 = vector.broadcast %123 : vector<16x1xf32> to vector<16x32xf32>
    %125 = arith.subf %109, %124 : vector<16x32xf32>
    %126 = arith.mulf %125, %125 : vector<16x32xf32>
    %cst_52 = arith.constant dense<0.000000e+00> : vector<16xf32>
    %127 = vector.multi_reduction <add>, %126, %cst_52 [1] : vector<16x32xf32> to vector<16xf32>
    %128 = vector.shape_cast %127 : vector<16xf32> to vector<16x1xf32>
    %cst_53 = arith.constant 3.200000e+01 : f32
    %129 = vector.broadcast %cst_53 : f32 to vector<16x1xf32>
    %130 = arith.divf %128, %129 : vector<16x1xf32>
    %131 = math.sqrt %130 : vector<16x1xf32>
    %132 = vector.broadcast %123 : vector<16x1xf32> to vector<16x32xf32>
    %133 = arith.subf %109, %132 : vector<16x32xf32>
    %cst_54 = arith.constant 9.99999974E-6 : f32
    %134 = vector.broadcast %cst_54 : f32 to vector<16x1xf32>
    %135 = arith.addf %131, %134 : vector<16x1xf32>
    %136 = vector.broadcast %135 : vector<16x1xf32> to vector<16x32xf32>
    %137 = arith.divf %133, %136 : vector<16x32xf32>
    %138 = vector.broadcast %112 : vector<1x32xf32> to vector<16x32xf32>
    %139 = arith.mulf %137, %138 : vector<16x32xf32>
    %140 = vector.broadcast %113 : vector<1x32xf32> to vector<16x32xf32>
    %141 = arith.addf %139, %140 : vector<16x32xf32>
    %142 = vector.shape_cast %141 : vector<16x32xf32> to vector<1x16x32xf32>
    %143 = vector.shape_cast %142 : vector<1x16x32xf32> to vector<1x16x32xf32>
    %144 = vector.broadcast %143 : vector<1x16x32xf32> to vector<12x16x32xf32>
    %c1_55 = arith.constant 1 : index
    %c0_56 = arith.constant 0 : index
    %c0_57 = arith.constant 0 : index
    %c0_58 = arith.constant 0 : index
    %145 = vector.load %arg2[%c1_55, %c0_56, %c0_57, %c0_58] : memref<2x12x8x32xf32, #tpu.memory_space<vmem>>, vector<1x12x8x32xf32>
    %146 = vector.shape_cast %145 : vector<1x12x8x32xf32> to vector<12x8x32xf32>
    "tpu.trace_start"() <{level = 10 : i32, message = "nth,ndh->ntd"}> : () -> ()
    %cst_59 = arith.constant dense<0.000000e+00> : vector<12x16x8xf32>
    %147 = tpu.matmul %144, %146, %cst_59 {dimension_numbers = #tpu.dot_dimension_numbers<[2], [2], [1], [1], [0, 0, 0, 1, 1, 1], [0], [0]>} : vector<12x16x32xf32>, vector<12x8x32xf32>, vector<12x16x8xf32> -> vector<12x16x8xf32>
    "tpu.trace_stop"() : () -> ()
    %148 = vector.extract_strided_slice %147 {offsets = [0, 0, 0], sizes = [4, 16, 8], strides = [1, 1, 1]} : vector<12x16x8xf32> to vector<4x16x8xf32>
    %149 = vector.extract_strided_slice %147 {offsets = [4, 0, 0], sizes = [4, 16, 8], strides = [1, 1, 1]} : vector<12x16x8xf32> to vector<4x16x8xf32>
    %150 = vector.extract_strided_slice %147 {offsets = [8, 0, 0], sizes = [4, 16, 8], strides = [1, 1, 1]} : vector<12x16x8xf32> to vector<4x16x8xf32>
    "tpu.trace_start"() <{level = 10 : i32, message = "ntd,nsd->nts"}> : () -> ()
    %cst_60 = arith.constant dense<0.000000e+00> : vector<4x16x16xf32>
    %151 = tpu.matmul %148, %149, %cst_60 {dimension_numbers = #tpu.dot_dimension_numbers<[2], [2], [1], [1], [0, 0, 0, 1, 1, 1], [0], [0]>} : vector<4x16x8xf32>, vector<4x16x8xf32>, vector<4x16x16xf32> -> vector<4x16x16xf32>
    "tpu.trace_stop"() : () -> ()
    %152 = vector.shape_cast %1 : vector<16x16xf32> to vector<1x16x16xf32>
    %153 = vector.broadcast %152 : vector<1x16x16xf32> to vector<4x16x16xf32>
    %154 = arith.addf %151, %153 : vector<4x16x16xf32>
    %cst_61 = arith.constant dense<0xFF800000> : vector<4x16xf32>
    %155 = vector.multi_reduction <maximumf>, %154, %cst_61 [2] : vector<4x16x16xf32> to vector<4x16xf32>
    %156 = vector.shape_cast %155 : vector<4x16xf32> to vector<4x16x1xf32>
    %157 = vector.broadcast %156 : vector<4x16x1xf32> to vector<4x16x16xf32>
    %158 = arith.subf %154, %157 : vector<4x16x16xf32>
    %159 = math.exp %158 : vector<4x16x16xf32>
    %cst_62 = arith.constant dense<0.000000e+00> : vector<4x16xf32>
    %160 = vector.multi_reduction <add>, %159, %cst_62 [2] : vector<4x16x16xf32> to vector<4x16xf32>
    %161 = vector.shape_cast %160 : vector<4x16xf32> to vector<4x16x1xf32>
    %162 = vector.broadcast %161 : vector<4x16x1xf32> to vector<4x16x16xf32>
    %163 = arith.divf %159, %162 : vector<4x16x16xf32>
    "tpu.trace_start"() <{level = 10 : i32, message = "nts,nsd->ntd"}> : () -> ()
    %cst_63 = arith.constant dense<0.000000e+00> : vector<4x16x8xf32>
    %164 = tpu.matmul %163, %150, %cst_63 {dimension_numbers = #tpu.dot_dimension_numbers<[2], [1], [1], [2], [0, 0, 0, 1, 1, 2], [0], [0]>} : vector<4x16x16xf32>, vector<4x16x8xf32>, vector<4x16x8xf32> -> vector<4x16x8xf32>
    "tpu.trace_stop"() : () -> ()
    %c1_64 = arith.constant 1 : index
    %c0_65 = arith.constant 0 : index
    %c0_66 = arith.constant 0 : index
    %c0_67 = arith.constant 0 : index
    %165 = vector.load %arg3[%c1_64, %c0_65, %c0_66, %c0_67] : memref<2x4x8x32xf32, #tpu.memory_space<vmem>>, vector<1x4x8x32xf32>
    %166 = vector.shape_cast %165 : vector<1x4x8x32xf32> to vector<4x8x32xf32>
    "tpu.trace_start"() <{level = 10 : i32, message = "ntd,ndj->ntj"}> : () -> ()
    %cst_68 = arith.constant dense<0.000000e+00> : vector<4x16x32xf32>
    %167 = tpu.matmul %164, %166, %cst_68 {dimension_numbers = #tpu.dot_dimension_numbers<[2], [1], [1], [2], [0, 0, 0, 1, 1, 2], [0], [0]>} : vector<4x16x8xf32>, vector<4x8x32xf32>, vector<4x16x32xf32> -> vector<4x16x32xf32>
    "tpu.trace_stop"() : () -> ()
    %cst_69 = arith.constant dense<0.000000e+00> : vector<16x32xf32>
    %168 = vector.multi_reduction <add>, %167, %cst_69 [0] : vector<4x16x32xf32> to vector<16x32xf32>
    %169 = vector.broadcast %114 : vector<1x32xf32> to vector<16x32xf32>
    %170 = arith.addf %168, %169 : vector<16x32xf32>
    %171 = arith.addf %109, %170 : vector<16x32xf32>
    %cst_70 = arith.constant dense<0.000000e+00> : vector<16xf32>
    %172 = vector.multi_reduction <add>, %171, %cst_70 [1] : vector<16x32xf32> to vector<16xf32>
    %173 = vector.shape_cast %172 : vector<16xf32> to vector<16x1xf32>
    %cst_71 = arith.constant 3.200000e+01 : f32
    %174 = vector.broadcast %cst_71 : f32 to vector<16x1xf32>
    %175 = arith.divf %173, %174 : vector<16x1xf32>
    %176 = vector.broadcast %175 : vector<16x1xf32> to vector<16x32xf32>
    %177 = arith.subf %171, %176 : vector<16x32xf32>
    %178 = arith.mulf %177, %177 : vector<16x32xf32>
    %cst_72 = arith.constant dense<0.000000e+00> : vector<16xf32>
    %179 = vector.multi_reduction <add>, %178, %cst_72 [1] : vector<16x32xf32> to vector<16xf32>
    %180 = vector.shape_cast %179 : vector<16xf32> to vector<16x1xf32>
    %cst_73 = arith.constant 3.200000e+01 : f32
    %181 = vector.broadcast %cst_73 : f32 to vector<16x1xf32>
    %182 = arith.divf %180, %181 : vector<16x1xf32>
    %183 = math.sqrt %182 : vector<16x1xf32>
    %184 = vector.broadcast %175 : vector<16x1xf32> to vector<16x32xf32>
    %185 = arith.subf %171, %184 : vector<16x32xf32>
    %cst_74 = arith.constant 9.99999974E-6 : f32
    %186 = vector.broadcast %cst_74 : f32 to vector<16x1xf32>
    %187 = arith.addf %183, %186 : vector<16x1xf32>
    %188 = vector.broadcast %187 : vector<16x1xf32> to vector<16x32xf32>
    %189 = arith.divf %185, %188 : vector<16x32xf32>
    %190 = vector.broadcast %115 : vector<1x32xf32> to vector<16x32xf32>
    %191 = arith.mulf %189, %190 : vector<16x32xf32>
    %192 = vector.broadcast %116 : vector<1x32xf32> to vector<16x32xf32>
    %193 = arith.addf %191, %192 : vector<16x32xf32>
    %c1_75 = arith.constant 1 : index
    %c0_76 = arith.constant 0 : index
    %c0_77 = arith.constant 0 : index
    %194 = vector.load %arg4[%c1_75, %c0_76, %c0_77] : memref<2x32x64xf32, #tpu.memory_space<vmem>>, vector<1x32x64xf32>
    %195 = vector.shape_cast %194 : vector<1x32x64xf32> to vector<32x64xf32>
    %cst_78 = arith.constant dense<0.000000e+00> : vector<16x64xf32>
    %196 = tpu.matmul %193, %195, %cst_78 {dimension_numbers = #tpu.dot_dimension_numbers<[1], [0], [0], [1], [0, 0, 1, 1], [], []>} : vector<16x32xf32>, vector<32x64xf32>, vector<16x64xf32> -> vector<16x64xf32>
    %197 = vector.broadcast %119 : vector<1x64xf32> to vector<16x64xf32>
    %198 = arith.addf %196, %197 : vector<16x64xf32>
    %cst_79 = arith.constant 5.000000e-01 : f32
    %199 = vector.broadcast %cst_79 : f32 to vector<16x64xf32>
    %200 = arith.mulf %199, %198 : vector<16x64xf32>
    %cst_80 = arith.constant 4.471500e-02 : f32
    %201 = vector.broadcast %cst_80 : f32 to vector<16x64xf32>
    %202 = arith.mulf %201, %198 : vector<16x64xf32>
    %203 = arith.mulf %202, %198 : vector<16x64xf32>
    %204 = arith.mulf %203, %198 : vector<16x64xf32>
    %205 = arith.addf %198, %204 : vector<16x64xf32>
    %cst_81 = arith.constant 7.978850e-01 : f32
    %206 = vector.broadcast %cst_81 : f32 to vector<16x64xf32>
    %207 = arith.mulf %206, %205 : vector<16x64xf32>
    %208 = math.tanh %207 : vector<16x64xf32>
    %cst_82 = arith.constant 1.000000e+00 : f32
    %209 = vector.broadcast %cst_82 : f32 to vector<16x64xf32>
    %210 = arith.addf %209, %208 : vector<16x64xf32>
    %211 = arith.mulf %200, %210 : vector<16x64xf32>
    %c1_83 = arith.constant 1 : index
    %c0_84 = arith.constant 0 : index
    %c0_85 = arith.constant 0 : index
    %212 = vector.load %arg5[%c1_83, %c0_84, %c0_85] : memref<2x64x32xf32, #tpu.memory_space<vmem>>, vector<1x64x32xf32>
    %213 = vector.shape_cast %212 : vector<1x64x32xf32> to vector<64x32xf32>
    %cst_86 = arith.constant dense<0.000000e+00> : vector<16x32xf32>
    %214 = tpu.matmul %211, %213, %cst_86 {dimension_numbers = #tpu.dot_dimension_numbers<[1], [0], [0], [1], [0, 0, 1, 1], [], []>} : vector<16x64xf32>, vector<64x32xf32>, vector<16x32xf32> -> vector<16x32xf32>
    %215 = vector.broadcast %117 : vector<1x32xf32> to vector<16x32xf32>
    %216 = arith.addf %214, %215 : vector<16x32xf32>
    %217 = arith.addf %171, %216 : vector<16x32xf32>
    %cst_87 = arith.constant dense<0.000000e+00> : vector<16xf32>
    %218 = vector.multi_reduction <add>, %217, %cst_87 [1] : vector<16x32xf32> to vector<16xf32>
    %219 = vector.shape_cast %218 : vector<16xf32> to vector<16x1xf32>
    %cst_88 = arith.constant 3.200000e+01 : f32
    %220 = vector.broadcast %cst_88 : f32 to vector<16x1xf32>
    %221 = arith.divf %219, %220 : vector<16x1xf32>
    %222 = vector.broadcast %221 : vector<16x1xf32> to vector<16x32xf32>
    %223 = arith.subf %217, %222 : vector<16x32xf32>
    %224 = arith.mulf %223, %223 : vector<16x32xf32>
    %cst_89 = arith.constant dense<0.000000e+00> : vector<16xf32>
    %225 = vector.multi_reduction <add>, %224, %cst_89 [1] : vector<16x32xf32> to vector<16xf32>
    %226 = vector.shape_cast %225 : vector<16xf32> to vector<16x1xf32>
    %cst_90 = arith.constant 3.200000e+01 : f32
    %227 = vector.broadcast %cst_90 : f32 to vector<16x1xf32>
    %228 = arith.divf %226, %227 : vector<16x1xf32>
    %229 = vector.broadcast %221 : vector<16x1xf32> to vector<16x32xf32>
    %230 = arith.subf %217, %229 : vector<16x32xf32>
    %cst_91 = arith.constant 9.99999974E-6 : f32
    %231 = vector.broadcast %cst_91 : f32 to vector<16x1xf32>
    %232 = arith.addf %228, %231 : vector<16x1xf32>
    %233 = math.sqrt %232 : vector<16x1xf32>
    %234 = vector.broadcast %233 : vector<16x1xf32> to vector<16x32xf32>
    %235 = arith.divf %230, %234 : vector<16x32xf32>
    %c0_92 = arith.constant 0 : index
    %c0_93 = arith.constant 0 : index
    %236 = vector.load %arg8[%c0_92, %c0_93] : memref<2x32xf32, #tpu.memory_space<vmem>>, vector<1x32xf32>
    %237 = vector.broadcast %236 : vector<1x32xf32> to vector<16x32xf32>
    %238 = arith.mulf %235, %237 : vector<16x32xf32>
    %c1_94 = arith.constant 1 : index
    %c0_95 = arith.constant 0 : index
    %239 = vector.load %arg8[%c1_94, %c0_95] : memref<2x32xf32, #tpu.memory_space<vmem>>, vector<1x32xf32>
    %240 = vector.broadcast %239 : vector<1x32xf32> to vector<16x32xf32>
    %241 = arith.addf %238, %240 : vector<16x32xf32>
    %c0_96 = arith.constant 0 : index
    %c0_97 = arith.constant 0 : index
    %242 = vector.load %arg9[%c0_96, %c0_97] : memref<16x32xf32, #tpu.memory_space<vmem>>, vector<16x32xf32>
    tpu.vector_store %arg9[%c0_96, %c0_97], %241 {strides = array<i32>} : memref<16x32xf32, #tpu.memory_space<vmem>>, vector<16x32xf32>,
    return
  }
}

</mosaic_0001>

<llo_original>
// kernel: gptneo_forward.1
$region0: #{gptneo_forward.1}
  #allocation0 [shape = 'u32[]', space=smem, size = 0x4, offset = 0x4, fixed_abs, tag = 'smem constant byte address 0x4 - core index']
  #allocation1 [shape = 'u32[72,128]{1,0:T(1,128)}', space=vmem, size = 0x9000, scoped, tag = 'internal scratch']
  %s0 = inlined_call_operand.vmem [shape: f32[16,32], index: 0, kind: input, shape index: {}]
  %s1 = inlined_call_operand.vmem [shape: f32[16,16], index: 1, kind: input, shape index: {}]
  %s2 = inlined_call_operand.vmem [shape: f32[2,12,8,32], index: 2, kind: input, shape index: {}]
  %s3 = inlined_call_operand.vmem [shape: f32[2,4,8,32], index: 3, kind: input, shape index: {}]
  %s4 = inlined_call_operand.vmem [shape: f32[2,32,64], index: 4, kind: input, shape index: {}]
  %s5 = inlined_call_operand.vmem [shape: f32[2,64,32], index: 5, kind: input, shape index: {}]
  %s6 = inlined_call_operand.vmem [shape: f32[2,6,32], index: 6, kind: input, shape index: {}]
  %s7 = inlined_call_operand.vmem [shape: f32[2,1,64], index: 7, kind: input, shape index: {}]
  %s8 = inlined_call_operand.vmem [shape: f32[2,32], index: 8, kind: input, shape index: {}]
  %s9 = inlined_call_operand.hbm [shape: f32[16,32], index: 9, kind: output, shape index: {}]
  %s10 = sld [smem:[#allocation0]]
  $region46: #{gptneo_forward.1} parent=0
    _
  %s12 = ssub.s32 1, %s10
  %s13 = scalar_select 0, %s12, %s10
  $region1: #{gptneo_forward.1} parent=0
    #allocation2 [shape = 'u8[8192]{0}', space=vmem, size = 0x2000, scoped, tag = 'output window, operand 0, single buffered']
    #allocation3 [shape = 's32[1]{0}', space=sflag, size = 0x4, scoped, tag = 'scoped memory for gptneo_forward.1']
    %14 = vsyncpa [#allocation3], 0
    // Predicated region
    $region2: #{gptneo_forward.1} parent=1 // pred_check
      _
    $region3: #{gptneo_forward.1} parent=1 // pred_check_branch
      %16 = sbr.rel (0) target = $region5
    $region4: #{gptneo_forward.1} parent=1 // pred_region
      _
    $region5: #{gptneo_forward.1} parent=1 // pred_fallthru
      _
    // Predicated region
    $region6: #{gptneo_forward.1} parent=1 // pred_check
      _
    $region7: #{gptneo_forward.1} parent=1 // pred_check_branch
      %18 = sbr.rel (0) target = $region9
    $region8: #{gptneo_forward.1} parent=1 // pred_region
      _
    $region9: #{gptneo_forward.1} parent=1 // pred_fallthru
      _
    // Predicated region
    $region10: #{gptneo_forward.1} parent=1 // pred_check
      _
    $region11: #{gptneo_forward.1} parent=1 // pred_check_branch
      %20 = sbr.rel (0) target = $region13
    $region12: #{gptneo_forward.1} parent=1 // pred_region
      _
    $region13: #{gptneo_forward.1} parent=1 // pred_fallthru
      _
    // Predicated region
    $region14: #{gptneo_forward.1} parent=1 // pred_check
      _
    $region15: #{gptneo_forward.1} parent=1 // pred_check_branch
      %22 = sbr.rel (0) target = $region17
    $region16: #{gptneo_forward.1} parent=1 // pred_region
      _
    $region17: #{gptneo_forward.1} parent=1 // pred_fallthru
      _
    // Predicated region
    $region18: #{gptneo_forward.1} parent=1 // pred_check
      _
    $region19: #{gptneo_forward.1} parent=1 // pred_check_branch
      %24 = sbr.rel (0) target = $region21
    $region20: #{gptneo_forward.1} parent=1 // pred_region
      _
    $region21: #{gptneo_forward.1} parent=1 // pred_fallthru
      _
    // Predicated region
    $region22: #{gptneo_forward.1} parent=1 // pred_check
      _
    $region23: #{gptneo_forward.1} parent=1 // pred_check_branch
      %26 = sbr.rel (0) target = $region25
    $region24: #{gptneo_forward.1} parent=1 // pred_region
      _
    $region25: #{gptneo_forward.1} parent=1 // pred_fallthru
      _
    // Predicated region
    $region26: #{gptneo_forward.1} parent=1 // pred_check
      _
    $region27: #{gptneo_forward.1} parent=1 // pred_check_branch
      %28 = sbr.rel (0) target = $region29
    $region28: #{gptneo_forward.1} parent=1 // pred_region
      _
    $region29: #{gptneo_forward.1} parent=1 // pred_fallthru
      _
    // Predicated region
    $region30: #{gptneo_forward.1} parent=1 // pred_check
      _
    $region31: #{gptneo_forward.1} parent=1 // pred_check_branch
      %30 = sbr.rel (0) target = $region33
    $region32: #{gptneo_forward.1} parent=1 // pred_region
      _
    $region33: #{gptneo_forward.1} parent=1 // pred_fallthru
      _
    // Predicated region
    $region34: #{gptneo_forward.1} parent=1 // pred_check
      _
    $region35: #{gptneo_forward.1} parent=1 // pred_check_branch
      %32 = sbr.rel (0) target = $region37
    $region36: #{gptneo_forward.1} parent=1 // pred_region
      _
    $region37: #{gptneo_forward.1} parent=1 // pred_fallthru
      _
    %v33 = vld [vmem:[%s0] sm:$0xff]
    %v34 = vld [vmem:[%s0 + $0x8] sm:$0xff]
    %v35 = vld [vmem:[%s1] sm:$0xff]
    %v36 = vld [vmem:[%s1 + $0x8] sm:$0xff]
    %v37 = vld [vmem:[%s6] sm:$0x3f]
    %v38 = vld [vmem:[%s7] sm:$0x1]
    %vm39 = vcmask 261120
    %v40 = vsel %vm39, %v33, 0.0
    %41 = vadd.xlane.f32.xlu0 %v40
    %v42 = vpop.xlane.xlu0 %41
    %v43 = vsel %vm39, %v34, 0.0
    %44 = vadd.xlane.f32.xlu0 %v43
    %v45 = vpop.xlane.xlu0 %44
    %v46 = vrcp.pop 32.0
    %v47 = vmul.f32 32.0, %v46
    %v48 = vsub.f32 1.0, %v47
    %v49 = vmul.f32 %v46, %v48
    %v50 = vadd.f32 %v46, %v49
    %vm51 = vweird.f32 %v46
    %v52 = vsel %vm51, %v46, %v50
    %v53 = vmul.f32 %v42, %v52
    %v54 = vmul.f32 %v45, %v52
    %v55 = vsub.f32 %v33, %v53
    %v56 = vsub.f32 %v34, %v54
    %v57 = vmul.f32 %v55, %v55
    %v58 = vmul.f32 %v56, %v56
    %v59 = vsel %vm39, %v57, 0.0
    %60 = vadd.xlane.f32.xlu0 %v59
    %v61 = vpop.xlane.xlu0 %60
    %v62 = vsel %vm39, %v58, 0.0
    %63 = vadd.xlane.f32.xlu0 %v62
    %v64 = vpop.xlane.xlu0 %63
    %v65 = vmul.f32 %v61, %v52
    %v66 = vmul.f32 %v64, %v52
    %v67 = vrsqrt.pop %v65
    %v68 = vmul.f32 %v67, %v65
    %v69 = vmul.f32 %v68, %v67
    %v70 = vmul.f32 0.5, %v69
    %v71 = vsub.f32 1.5, %v70
    %v72 = vmul.f32 %v67, %v71
    %v73 = vmul.f32 %v65, %v72
    %vm74 = vcmp.eq.f32.partialorder %v65, inf
    %v75 = vsel %vm74, %v65, %v73
    %vm76 = vcmp.eq.f32.partialorder %v65, 0.0
    %v77 = vand.u32 %v65, 2147483648
    %v78 = vsel %vm76, %v77, %v75
    %v79 = vrsqrt.pop %v66
    %v80 = vmul.f32 %v79, %v66
    %v81 = vmul.f32 %v80, %v79
    %v82 = vmul.f32 0.5, %v81
    %v83 = vsub.f32 1.5, %v82
    %v84 = vmul.f32 %v79, %v83
    %v85 = vmul.f32 %v66, %v84
    %vm86 = vcmp.eq.f32.partialorder %v66, inf
    %v87 = vsel %vm86, %v66, %v85
    %vm88 = vcmp.eq.f32.partialorder %v66, 0.0
    %v89 = vand.u32 %v66, 2147483648
    %v90 = vsel %vm88, %v89, %v87
    %v91 = vadd.f32 %v78, 1e-05
    %v92 = vadd.f32 %v90, 1e-05
    %v93 = vrcp.pop %v91
    %v94 = vmul.f32 %v91, %v93
    %v95 = vsub.f32 1.0, %v94
    %v96 = vmul.f32 %v93, %v95
    %v97 = vadd.f32 %v93, %v96
    %vm98 = vweird.f32 %v91
    %vm99 = vweird.f32 %v93
    %vm100 = vmor %vm98, %vm99
    %v101 = vsel %vm100, %v93, %v97
    %v102 = vand.u32 2147483647, %v91
    %vm103 = vcmp.eq.f32.partialorder %v102, 8.507059e+37
    %v104 = vand.u32 %v91, 2147483648
    %v105 = vor.u32 1.1754944e-38, %v104
    %v106 = vsel %vm103, %v105, %v101
    %v107 = vmul.f32 %v55, %v106
    %v108 = vrcp.pop %v92
    %v109 = vmul.f32 %v92, %v108
    %v110 = vsub.f32 1.0, %v109
    %v111 = vmul.f32 %v108, %v110
    %v112 = vadd.f32 %v108, %v111
    %vm113 = vweird.f32 %v92
    %vm114 = vweird.f32 %v108
    %vm115 = vmor %vm113, %vm114
    %v116 = vsel %vm115, %v108, %v112
    %v117 = vand.u32 2147483647, %v92
    %vm118 = vcmp.eq.f32.partialorder %v117, 8.507059e+37
    %v119 = vand.u32 %v92, 2147483648
    %v120 = vor.u32 1.1754944e-38, %v119
    %v121 = vsel %vm118, %v120, %v116
    %v122 = vmul.f32 %v56, %v121
    %v123 = vperm.slane %v37, 0
    %v124 = vmul.f32 %v107, %v123
    %v125 = vmul.f32 %v122, %v123
    %v126 = vperm.slane %v37, 1
    %v127 = vadd.f32 %v124, %v126
    %v128 = vadd.f32 %v125, %v126
    %v129 = vld [vmem:[%s2] sm:$0xff]
    %v130 = vld [vmem:[%s2 + $0x8] sm:$0xff]
    %v131 = vld [vmem:[%s2 + $0x10] sm:$0xff]
    %v132 = vld [vmem:[%s2 + $0x18] sm:$0xff]
    %v133 = vld [vmem:[%s2 + $0x20] sm:$0xff]
    %v134 = vld [vmem:[%s2 + $0x28] sm:$0xff]
    %v135 = vld [vmem:[%s2 + $0x30] sm:$0xff]
    %v136 = vld [vmem:[%s2 + $0x38] sm:$0xff]
    %v137 = vld [vmem:[%s2 + $0x40] sm:$0xff]
    %v138 = vld [vmem:[%s2 + $0x48] sm:$0xff]
    %v139 = vld [vmem:[%s2 + $0x50] sm:$0xff]
    %v140 = vld [vmem:[%s2 + $0x58] sm:$0xff]
    %v142 = vsel %vm39, %v127, 0
    %v145 = vsel %vm39, %v128, 0
    %v148 = vsel %vm39, %v129, 0
    %150 = vmatpush.xpose.msra.mxu0 0.0
    %151 = vmatpush.xpose.msra.mxu0 0.0
    %152 = vmatpush.xpose.msra.mxu0 0.0
    %153 = vmatpush.xpose.msra.mxu0 0.0
    %154 = vmatpush.xpose.msra.mxu0 0.0
    %155 = vmatpush.xpose.msra.mxu0 0.0
    %156 = vmatpush.xpose.msra.mxu0 0.0
    %157 = vmatpush.xpose.msra.mxu0 0.0
    %158 = vmatpush.xpose.msra.mxu0 0.0
    %159 = vmatpush.xpose.msra.mxu0 0.0
    %160 = vmatpush.xpose.msra.mxu0 0.0
    %161 = vmatpush.xpose.msra.mxu0 0.0
    %162 = vmatpush.xpose.msra.mxu0 0.0
    %163 = vmatpush.xpose.msra.mxu0 0.0
    %164 = vmatpush.xpose.msra.mxu0 0.0
    %165 = vmatpush.xpose.msra.mxu0 %v148
    %166 = vmatmul.f32.gmra.mxu0 %v142
    %v167 = vpop.f32.mrf.mxu0
    %v168 = vadd.f32 0.0, %v167
    %169 = vmatmul.f32.gmra.mxu0 %v145
    %v170 = vpop.f32.mrf.mxu0
    %v171 = vadd.f32 0.0, %v170
    %172 = vdwg.mxu0
    %v174 = vsel %vm39, %v130, 0
    %176 = vmatpush.xpose.msra.mxu0 0.0
    %177 = vmatpush.xpose.msra.mxu0 0.0
    %178 = vmatpush.xpose.msra.mxu0 0.0
    %179 = vmatpush.xpose.msra.mxu0 0.0
    %180 = vmatpush.xpose.msra.mxu0 0.0
    %181 = vmatpush.xpose.msra.mxu0 0.0
    %182 = vmatpush.xpose.msra.mxu0 0.0
    %183 = vmatpush.xpose.msra.mxu0 0.0
    %184 = vmatpush.xpose.msra.mxu0 0.0
    %185 = vmatpush.xpose.msra.mxu0 0.0
    %186 = vmatpush.xpose.msra.mxu0 0.0
    %187 = vmatpush.xpose.msra.mxu0 0.0
    %188 = vmatpush.xpose.msra.mxu0 0.0
    %189 = vmatpush.xpose.msra.mxu0 0.0
    %190 = vmatpush.xpose.msra.mxu0 0.0
    %191 = vmatpush.xpose.msra.mxu0 %v174
    %192 = vmatmul.f32.gmra.mxu0 %v142
    %v193 = vpop.f32.mrf.mxu0
    %v194 = vadd.f32 0.0, %v193
    %195 = vmatmul.f32.gmra.mxu0 %v145
    %v196 = vpop.f32.mrf.mxu0
    %v197 = vadd.f32 0.0, %v196
    %198 = vdwg.mxu0
    %v200 = vsel %vm39, %v131, 0
    %202 = vmatpush.xpose.msra.mxu0 0.0
    %203 = vmatpush.xpose.msra.mxu0 0.0
    %204 = vmatpush.xpose.msra.mxu0 0.0
    %205 = vmatpush.xpose.msra.mxu0 0.0
    %206 = vmatpush.xpose.msra.mxu0 0.0
    %207 = vmatpush.xpose.msra.mxu0 0.0
    %208 = vmatpush.xpose.msra.mxu0 0.0
    %209 = vmatpush.xpose.msra.mxu0 0.0
    %210 = vmatpush.xpose.msra.mxu0 0.0
    %211 = vmatpush.xpose.msra.mxu0 0.0
    %212 = vmatpush.xpose.msra.mxu0 0.0
    %213 = vmatpush.xpose.msra.mxu0 0.0
    %214 = vmatpush.xpose.msra.mxu0 0.0
    %215 = vmatpush.xpose.msra.mxu0 0.0
    %216 = vmatpush.xpose.msra.mxu0 0.0
    %217 = vmatpush.xpose.msra.mxu0 %v200
    %218 = vmatmul.f32.gmra.mxu0 %v142
    %v219 = vpop.f32.mrf.mxu0
    %v220 = vadd.f32 0.0, %v219
    %221 = vmatmul.f32.gmra.mxu0 %v145
    %v222 = vpop.f32.mrf.mxu0
    %v223 = vadd.f32 0.0, %v222
    %224 = vdwg.mxu0
    %v226 = vsel %vm39, %v132, 0
    %228 = vmatpush.xpose.msra.mxu0 0.0
    %229 = vmatpush.xpose.msra.mxu0 0.0
    %230 = vmatpush.xpose.msra.mxu0 0.0
    %231 = vmatpush.xpose.msra.mxu0 0.0
    %232 = vmatpush.xpose.msra.mxu0 0.0
    %233 = vmatpush.xpose.msra.mxu0 0.0
    %234 = vmatpush.xpose.msra.mxu0 0.0
    %235 = vmatpush.xpose.msra.mxu0 0.0
    %236 = vmatpush.xpose.msra.mxu0 0.0
    %237 = vmatpush.xpose.msra.mxu0 0.0
    %238 = vmatpush.xpose.msra.mxu0 0.0
    %239 = vmatpush.xpose.msra.mxu0 0.0
    %240 = vmatpush.xpose.msra.mxu0 0.0
    %241 = vmatpush.xpose.msra.mxu0 0.0
    %242 = vmatpush.xpose.msra.mxu0 0.0
    %243 = vmatpush.xpose.msra.mxu0 %v226
    %244 = vmatmul.f32.gmra.mxu0 %v142
    %v245 = vpop.f32.mrf.mxu0
    %v246 = vadd.f32 0.0, %v245
    %247 = vmatmul.f32.gmra.mxu0 %v145
    %v248 = vpop.f32.mrf.mxu0
    %v249 = vadd.f32 0.0, %v248
    %250 = vdwg.mxu0
    %v252 = vsel %vm39, %v133, 0
    %254 = vmatpush.xpose.msra.mxu0 0.0
    %255 = vmatpush.xpose.msra.mxu0 0.0
    %256 = vmatpush.xpose.msra.mxu0 0.0
    %257 = vmatpush.xpose.msra.mxu0 0.0
    %258 = vmatpush.xpose.msra.mxu0 0.0
    %259 = vmatpush.xpose.msra.mxu0 0.0
    %260 = vmatpush.xpose.msra.mxu0 0.0
    %261 = vmatpush.xpose.msra.mxu0 0.0
    %262 = vmatpush.xpose.msra.mxu0 0.0
    %263 = vmatpush.xpose.msra.mxu0 0.0
    %264 = vmatpush.xpose.msra.mxu0 0.0
    %265 = vmatpush.xpose.msra.mxu0 0.0
    %266 = vmatpush.xpose.msra.mxu0 0.0
    %267 = vmatpush.xpose.msra.mxu0 0.0
    %268 = vmatpush.xpose.msra.mxu0 0.0
    %269 = vmatpush.xpose.msra.mxu0 %v252
    %270 = vmatmul.f32.gmra.mxu0 %v142
    %v271 = vpop.f32.mrf.mxu0
    %v272 = vadd.f32 0.0, %v271
    %273 = vmatmul.f32.gmra.mxu0 %v145
    %v274 = vpop.f32.mrf.mxu0
    %v275 = vadd.f32 0.0, %v274
    %276 = vdwg.mxu0
    %v278 = vsel %vm39, %v134, 0
    %280 = vmatpush.xpose.msra.mxu0 0.0
    %281 = vmatpush.xpose.msra.mxu0 0.0
    %282 = vmatpush.xpose.msra.mxu0 0.0
    %283 = vmatpush.xpose.msra.mxu0 0.0
    %284 = vmatpush.xpose.msra.mxu0 0.0
    %285 = vmatpush.xpose.msra.mxu0 0.0
    %286 = vmatpush.xpose.msra.mxu0 0.0
    %287 = vmatpush.xpose.msra.mxu0 0.0
    %288 = vmatpush.xpose.msra.mxu0 0.0
    %289 = vmatpush.xpose.msra.mxu0 0.0
    %290 = vmatpush.xpose.msra.mxu0 0.0
    %291 = vmatpush.xpose.msra.mxu0 0.0
    %292 = vmatpush.xpose.msra.mxu0 0.0
    %293 = vmatpush.xpose.msra.mxu0 0.0
    %294 = vmatpush.xpose.msra.mxu0 0.0
    %295 = vmatpush.xpose.msra.mxu0 %v278
    %296 = vmatmul.f32.gmra.mxu0 %v142
    %v297 = vpop.f32.mrf.mxu0
    %v298 = vadd.f32 0.0, %v297
    %299 = vmatmul.f32.gmra.mxu0 %v145
    %v300 = vpop.f32.mrf.mxu0
    %v301 = vadd.f32 0.0, %v300
    %302 = vdwg.mxu0
    %v304 = vsel %vm39, %v135, 0
    %306 = vmatpush.xpose.msra.mxu0 0.0
    %307 = vmatpush.xpose.msra.mxu0 0.0
    %308 = vmatpush.xpose.msra.mxu0 0.0
    %309 = vmatpush.xpose.msra.mxu0 0.0
    %310 = vmatpush.xpose.msra.mxu0 0.0
    %311 = vmatpush.xpose.msra.mxu0 0.0
    %312 = vmatpush.xpose.msra.mxu0 0.0
    %313 = vmatpush.xpose.msra.mxu0 0.0
    %314 = vmatpush.xpose.msra.mxu0 0.0
    %315 = vmatpush.xpose.msra.mxu0 0.0
    %316 = vmatpush.xpose.msra.mxu0 0.0
    %317 = vmatpush.xpose.msra.mxu0 0.0
    %318 = vmatpush.xpose.msra.mxu0 0.0
    %319 = vmatpush.xpose.msra.mxu0 0.0
    %320 = vmatpush.xpose.msra.mxu0 0.0
    %321 = vmatpush.xpose.msra.mxu0 %v304
    %322 = vmatmul.f32.gmra.mxu0 %v142
    %v323 = vpop.f32.mrf.mxu0
    %v324 = vadd.f32 0.0, %v323
    %325 = vmatmul.f32.gmra.mxu0 %v145
    %v326 = vpop.f32.mrf.mxu0
    %v327 = vadd.f32 0.0, %v326
    %328 = vdwg.mxu0
    %v330 = vsel %vm39, %v136, 0
    %332 = vmatpush.xpose.msra.mxu0 0.0
    %333 = vmatpush.xpose.msra.mxu0 0.0
    %334 = vmatpush.xpose.msra.mxu0 0.0
    %335 = vmatpush.xpose.msra.mxu0 0.0
    %336 = vmatpush.xpose.msra.mxu0 0.0
    %337 = vmatpush.xpose.msra.mxu0 0.0
    %338 = vmatpush.xpose.msra.mxu0 0.0
    %339 = vmatpush.xpose.msra.mxu0 0.0
    %340 = vmatpush.xpose.msra.mxu0 0.0
    %341 = vmatpush.xpose.msra.mxu0 0.0
    %342 = vmatpush.xpose.msra.mxu0 0.0
    %343 = vmatpush.xpose.msra.mxu0 0.0
    %344 = vmatpush.xpose.msra.mxu0 0.0
    %345 = vmatpush.xpose.msra.mxu0 0.0
    %346 = vmatpush.xpose.msra.mxu0 0.0
    %347 = vmatpush.xpose.msra.mxu0 %v330
    %348 = vmatmul.f32.gmra.mxu0 %v142
    %v349 = vpop.f32.mrf.mxu0
    %v350 = vadd.f32 0.0, %v349
    %351 = vmatmul.f32.gmra.mxu0 %v145
    %v352 = vpop.f32.mrf.mxu0
    %v353 = vadd.f32 0.0, %v352
    %354 = vdwg.mxu0
    %v356 = vsel %vm39, %v137, 0
    %358 = vmatpush.xpose.msra.mxu0 0.0
    %359 = vmatpush.xpose.msra.mxu0 0.0
    %360 = vmatpush.xpose.msra.mxu0 0.0
    %361 = vmatpush.xpose.msra.mxu0 0.0
    %362 = vmatpush.xpose.msra.mxu0 0.0
    %363 = vmatpush.xpose.msra.mxu0 0.0
    %364 = vmatpush.xpose.msra.mxu0 0.0
    %365 = vmatpush.xpose.msra.mxu0 0.0
    %366 = vmatpush.xpose.msra.mxu0 0.0
    %367 = vmatpush.xpose.msra.mxu0 0.0
    %368 = vmatpush.xpose.msra.mxu0 0.0
    %369 = vmatpush.xpose.msra.mxu0 0.0
    %370 = vmatpush.xpose.msra.mxu0 0.0
    %371 = vmatpush.xpose.msra.mxu0 0.0
    %372 = vmatpush.xpose.msra.mxu0 0.0
    %373 = vmatpush.xpose.msra.mxu0 %v356
    %374 = vmatmul.f32.gmra.mxu0 %v142
    %v375 = vpop.f32.mrf.mxu0
    %v376 = vadd.f32 0.0, %v375
    %377 = vmatmul.f32.gmra.mxu0 %v145
    %v378 = vpop.f32.mrf.mxu0
    %v379 = vadd.f32 0.0, %v378
    %380 = vdwg.mxu0
    %v382 = vsel %vm39, %v138, 0
    %384 = vmatpush.xpose.msra.mxu0 0.0
    %385 = vmatpush.xpose.msra.mxu0 0.0
    %386 = vmatpush.xpose.msra.mxu0 0.0
    %387 = vmatpush.xpose.msra.mxu0 0.0
    %388 = vmatpush.xpose.msra.mxu0 0.0
    %389 = vmatpush.xpose.msra.mxu0 0.0
    %390 = vmatpush.xpose.msra.mxu0 0.0
    %391 = vmatpush.xpose.msra.mxu0 0.0
    %392 = vmatpush.xpose.msra.mxu0 0.0
    %393 = vmatpush.xpose.msra.mxu0 0.0
    %394 = vmatpush.xpose.msra.mxu0 0.0
    %395 = vmatpush.xpose.msra.mxu0 0.0
    %396 = vmatpush.xpose.msra.mxu0 0.0
    %397 = vmatpush.xpose.msra.mxu0 0.0
    %398 = vmatpush.xpose.msra.mxu0 0.0
    %399 = vmatpush.xpose.msra.mxu0 %v382
    %400 = vmatmul.f32.gmra.mxu0 %v142
    %v401 = vpop.f32.mrf.mxu0
    %v402 = vadd.f32 0.0, %v401
    %403 = vmatmul.f32.gmra.mxu0 %v145
    %v404 = vpop.f32.mrf.mxu0
    %v405 = vadd.f32 0.0, %v404
    %406 = vdwg.mxu0
    %v408 = vsel %vm39, %v139, 0
    %410 = vmatpush.xpose.msra.mxu0 0.0
    %411 = vmatpush.xpose.msra.mxu0 0.0
    %412 = vmatpush.xpose.msra.mxu0 0.0
    %413 = vmatpush.xpose.msra.mxu0 0.0
    %414 = vmatpush.xpose.msra.mxu0 0.0
    %415 = vmatpush.xpose.msra.mxu0 0.0
    %416 = vmatpush.xpose.msra.mxu0 0.0
    %417 = vmatpush.xpose.msra.mxu0 0.0
    %418 = vmatpush.xpose.msra.mxu0 0.0
    %419 = vmatpush.xpose.msra.mxu0 0.0
    %420 = vmatpush.xpose.msra.mxu0 0.0
    %421 = vmatpush.xpose.msra.mxu0 0.0
    %422 = vmatpush.xpose.msra.mxu0 0.0
    %423 = vmatpush.xpose.msra.mxu0 0.0
    %424 = vmatpush.xpose.msra.mxu0 0.0
    %425 = vmatpush.xpose.msra.mxu0 %v408
    %426 = vmatmul.f32.gmra.mxu0 %v142
    %v427 = vpop.f32.mrf.mxu0
    %v428 = vadd.f32 0.0, %v427
    %429 = vmatmul.f32.gmra.mxu0 %v145
    %v430 = vpop.f32.mrf.mxu0
    %v431 = vadd.f32 0.0, %v430
    %432 = vdwg.mxu0
    %v434 = vsel %vm39, %v140, 0
    %436 = vmatpush.xpose.msra.mxu0 0.0
    %437 = vmatpush.xpose.msra.mxu0 0.0
    %438 = vmatpush.xpose.msra.mxu0 0.0
    %439 = vmatpush.xpose.msra.mxu0 0.0
    %440 = vmatpush.xpose.msra.mxu0 0.0
    %441 = vmatpush.xpose.msra.mxu0 0.0
    %442 = vmatpush.xpose.msra.mxu0 0.0
    %443 = vmatpush.xpose.msra.mxu0 0.0
    %444 = vmatpush.xpose.msra.mxu0 0.0
    %445 = vmatpush.xpose.msra.mxu0 0.0
    %446 = vmatpush.xpose.msra.mxu0 0.0
    %447 = vmatpush.xpose.msra.mxu0 0.0
    %448 = vmatpush.xpose.msra.mxu0 0.0
    %449 = vmatpush.xpose.msra.mxu0 0.0
    %450 = vmatpush.xpose.msra.mxu0 0.0
    %451 = vmatpush.xpose.msra.mxu0 %v434
    %452 = vmatmul.f32.gmra.mxu0 %v142
    %v453 = vpop.f32.mrf.mxu0
    %v454 = vadd.f32 0.0, %v453
    %455 = vmatmul.f32.gmra.mxu0 %v145
    %v456 = vpop.f32.mrf.mxu0
    %v457 = vadd.f32 0.0, %v456
    %458 = vdwg.mxu0
    %vm459 = vcmask 64512
    %v461 = vsel %vm459, %v168, 0
    %v464 = vsel %vm459, %v171, 0
    %v467 = vsel %vm459, %v272, 0
    %v470 = vsel %vm459, %v275, 0
    %472 = vmatpush.xpose.msra.mxu0 0.0
    %473 = vmatpush.xpose.msra.mxu0 0.0
    %474 = vmatpush.xpose.msra.mxu0 0.0
    %475 = vmatpush.xpose.msra.mxu0 0.0
    %476 = vmatpush.xpose.msra.mxu0 0.0
    %477 = vmatpush.xpose.msra.mxu0 0.0
    %478 = vmatpush.xpose.msra.mxu0 0.0
    %479 = vmatpush.xpose.msra.mxu0 0.0
    %480 = vmatpush.xpose.msra.mxu0 0.0
    %481 = vmatpush.xpose.msra.mxu0 0.0
    %482 = vmatpush.xpose.msra.mxu0 0.0
    %483 = vmatpush.xpose.msra.mxu0 0.0
    %484 = vmatpush.xpose.msra.mxu0 0.0
    %485 = vmatpush.xpose.msra.mxu0 0.0
    %486 = vmatpush.xpose.msra.mxu0 %v470
    %487 = vmatpush.xpose.msra.mxu0 %v467
    %488 = vmatmul.f32.gmra.mxu0 %v461
    %v489 = vpop.f32.mrf.mxu0
    %v490 = vadd.f32 %v35, %v489
    %491 = vmatmul.f32.gmra.mxu0 %v464
    %v492 = vpop.f32.mrf.mxu0
    %v493 = vadd.f32 %v36, %v492
    %494 = vdwg.mxu0
    %v496 = vsel %vm459, %v194, 0
    %v499 = vsel %vm459, %v197, 0
    %v502 = vsel %vm459, %v298, 0
    %v505 = vsel %vm459, %v301, 0
    %507 = vmatpush.xpose.msra.mxu0 0.0
    %508 = vmatpush.xpose.msra.mxu0 0.0
    %509 = vmatpush.xpose.msra.mxu0 0.0
    %510 = vmatpush.xpose.msra.mxu0 0.0
    %511 = vmatpush.xpose.msra.mxu0 0.0
    %512 = vmatpush.xpose.msra.mxu0 0.0
    %513 = vmatpush.xpose.msra.mxu0 0.0
    %514 = vmatpush.xpose.msra.mxu0 0.0
    %515 = vmatpush.xpose.msra.mxu0 0.0
    %516 = vmatpush.xpose.msra.mxu0 0.0
    %517 = vmatpush.xpose.msra.mxu0 0.0
    %518 = vmatpush.xpose.msra.mxu0 0.0
    %519 = vmatpush.xpose.msra.mxu0 0.0
    %520 = vmatpush.xpose.msra.mxu0 0.0
    %521 = vmatpush.xpose.msra.mxu0 %v505
    %522 = vmatpush.xpose.msra.mxu0 %v502
    %523 = vmatmul.f32.gmra.mxu0 %v496
    %v524 = vpop.f32.mrf.mxu0
    %v525 = vadd.f32 %v35, %v524
    %526 = vmatmul.f32.gmra.mxu0 %v499
    %v527 = vpop.f32.mrf.mxu0
    %v528 = vadd.f32 %v36, %v527
    %529 = vdwg.mxu0
    %v531 = vsel %vm459, %v220, 0
    %v534 = vsel %vm459, %v223, 0
    %v537 = vsel %vm459, %v324, 0
    %v540 = vsel %vm459, %v327, 0
    %542 = vmatpush.xpose.msra.mxu0 0.0
    %543 = vmatpush.xpose.msra.mxu0 0.0
    %544 = vmatpush.xpose.msra.mxu0 0.0
    %545 = vmatpush.xpose.msra.mxu0 0.0
    %546 = vmatpush.xpose.msra.mxu0 0.0
    %547 = vmatpush.xpose.msra.mxu0 0.0
    %548 = vmatpush.xpose.msra.mxu0 0.0
    %549 = vmatpush.xpose.msra.mxu0 0.0
    %550 = vmatpush.xpose.msra.mxu0 0.0
    %551 = vmatpush.xpose.msra.mxu0 0.0
    %552 = vmatpush.xpose.msra.mxu0 0.0
    %553 = vmatpush.xpose.msra.mxu0 0.0
    %554 = vmatpush.xpose.msra.mxu0 0.0
    %555 = vmatpush.xpose.msra.mxu0 0.0
    %556 = vmatpush.xpose.msra.mxu0 %v540
    %557 = vmatpush.xpose.msra.mxu0 %v537
    %558 = vmatmul.f32.gmra.mxu0 %v531
    %v559 = vpop.f32.mrf.mxu0
    %v560 = vadd.f32 %v35, %v559
    %561 = vmatmul.f32.gmra.mxu0 %v534
    %v562 = vpop.f32.mrf.mxu0
    %v563 = vadd.f32 %v36, %v562
    %564 = vdwg.mxu0
    %v566 = vsel %vm459, %v246, 0
    %v569 = vsel %vm459, %v249, 0
    %v572 = vsel %vm459, %v350, 0
    %v575 = vsel %vm459, %v353, 0
    %577 = vmatpush.xpose.msra.mxu0 0.0
    %578 = vmatpush.xpose.msra.mxu0 0.0
    %579 = vmatpush.xpose.msra.mxu0 0.0
    %580 = vmatpush.xpose.msra.mxu0 0.0
    %581 = vmatpush.xpose.msra.mxu0 0.0
    %582 = vmatpush.xpose.msra.mxu0 0.0
    %583 = vmatpush.xpose.msra.mxu0 0.0
    %584 = vmatpush.xpose.msra.mxu0 0.0
    %585 = vmatpush.xpose.msra.mxu0 0.0
    %586 = vmatpush.xpose.msra.mxu0 0.0
    %587 = vmatpush.xpose.msra.mxu0 0.0
    %588 = vmatpush.xpose.msra.mxu0 0.0
    %589 = vmatpush.xpose.msra.mxu0 0.0
    %590 = vmatpush.xpose.msra.mxu0 0.0
    %591 = vmatpush.xpose.msra.mxu0 %v575
    %592 = vmatpush.xpose.msra.mxu0 %v572
    %593 = vmatmul.f32.gmra.mxu0 %v566
    %v594 = vpop.f32.mrf.mxu0
    %v595 = vadd.f32 %v35, %v594
    %596 = vmatmul.f32.gmra.mxu0 %v569
    %v597 = vpop.f32.mrf.mxu0
    %v598 = vadd.f32 %v36, %v597
    %599 = vdwg.mxu0
    %vm600 = vcmask 130048
    %v601 = vsel %vm600, %v490, -inf
    %602 = vmax.xlane.f32.xlu0 %v601
    %v603 = vpop.xlane.xlu0 %602
    %v604 = vsel %vm600, %v493, -inf
    %605 = vmax.xlane.f32.xlu0 %v604
    %v606 = vpop.xlane.xlu0 %605
    %v607 = vsel %vm600, %v525, -inf
    %608 = vmax.xlane.f32.xlu0 %v607
    %v609 = vpop.xlane.xlu0 %608
    %v610 = vsel %vm600, %v528, -inf
    %611 = vmax.xlane.f32.xlu0 %v610
    %v612 = vpop.xlane.xlu0 %611
    %v613 = vsel %vm600, %v560, -inf
    %614 = vmax.xlane.f32.xlu0 %v613
    %v615 = vpop.xlane.xlu0 %614
    %v616 = vsel %vm600, %v563, -inf
    %617 = vmax.xlane.f32.xlu0 %v616
    %v618 = vpop.xlane.xlu0 %617
    %v619 = vsel %vm600, %v595, -inf
    %620 = vmax.xlane.f32.xlu0 %v619
    %v621 = vpop.xlane.xlu0 %620
    %v622 = vsel %vm600, %v598, -inf
    %623 = vmax.xlane.f32.xlu0 %v622
    %v624 = vpop.xlane.xlu0 %623
    %v625 = vsub.f32 %v490, %v603
    %v626 = vsub.f32 %v493, %v606
    %v627 = vsub.f32 %v525, %v609
    %v628 = vsub.f32 %v528, %v612
    %v629 = vsub.f32 %v560, %v615
    %v630 = vsub.f32 %v563, %v618
    %v631 = vsub.f32 %v595, %v621
    %v632 = vsub.f32 %v598, %v624
    %v633 = vmul.f32 %v625, 1.442695
    %v634 = vpow.pop %v633
    %v635 = vmul.f32 %v626, 1.442695
    %v636 = vpow.pop %v635
    %v637 = vmul.f32 %v627, 1.442695
    %v638 = vpow.pop %v637
    %v639 = vmul.f32 %v628, 1.442695
    %v640 = vpow.pop %v639
    %v641 = vmul.f32 %v629, 1.442695
    %v642 = vpow.pop %v641
    %v643 = vmul.f32 %v630, 1.442695
    %v644 = vpow.pop %v643
    %v645 = vmul.f32 %v631, 1.442695
    %v646 = vpow.pop %v645
    %v647 = vmul.f32 %v632, 1.442695
    %v648 = vpow.pop %v647
    %v649 = vsel %vm600, %v634, 0.0
    %650 = vadd.xlane.f32.xlu0 %v649
    %v651 = vpop.xlane.xlu0 %650
    %v652 = vsel %vm600, %v636, 0.0
    %653 = vadd.xlane.f32.xlu0 %v652
    %v654 = vpop.xlane.xlu0 %653
    %v655 = vsel %vm600, %v638, 0.0
    %656 = vadd.xlane.f32.xlu0 %v655
    %v657 = vpop.xlane.xlu0 %656
    %v658 = vsel %vm600, %v640, 0.0
    %659 = vadd.xlane.f32.xlu0 %v658
    %v660 = vpop.xlane.xlu0 %659
    %v661 = vsel %vm600, %v642, 0.0
    %662 = vadd.xlane.f32.xlu0 %v661
    %v663 = vpop.xlane.xlu0 %662
    %v664 = vsel %vm600, %v644, 0.0
    %665 = vadd.xlane.f32.xlu0 %v664
    %v666 = vpop.xlane.xlu0 %665
    %v667 = vsel %vm600, %v646, 0.0
    %668 = vadd.xlane.f32.xlu0 %v667
    %v669 = vpop.xlane.xlu0 %668
    %v670 = vsel %vm600, %v648, 0.0
    %671 = vadd.xlane.f32.xlu0 %v670
    %v672 = vpop.xlane.xlu0 %671
    %v673 = vrcp.pop %v651
    %v674 = vmul.f32 %v651, %v673
    %v675 = vsub.f32 1.0, %v674
    %v676 = vmul.f32 %v673, %v675
    %v677 = vadd.f32 %v673, %v676
    %vm678 = vweird.f32 %v651
    %vm679 = vweird.f32 %v673
    %vm680 = vmor %vm678, %vm679
    %v681 = vsel %vm680, %v673, %v677
    %v682 = vand.u32 2147483647, %v651
    %vm683 = vcmp.eq.f32.partialorder %v682, 8.507059e+37
    %v684 = vand.u32 %v651, 2147483648
    %v685 = vor.u32 1.1754944e-38, %v684
    %v686 = vsel %vm683, %v685, %v681
    %v687 = vmul.f32 %v634, %v686
    %v688 = vrcp.pop %v654
    %v689 = vmul.f32 %v654, %v688
    %v690 = vsub.f32 1.0, %v689
    %v691 = vmul.f32 %v688, %v690
    %v692 = vadd.f32 %v688, %v691
    %vm693 = vweird.f32 %v654
    %vm694 = vweird.f32 %v688
    %vm695 = vmor %vm693, %vm694
    %v696 = vsel %vm695, %v688, %v692
    %v697 = vand.u32 2147483647, %v654
    %vm698 = vcmp.eq.f32.partialorder %v697, 8.507059e+37
    %v699 = vand.u32 %v654, 2147483648
    %v700 = vor.u32 1.1754944e-38, %v699
    %v701 = vsel %vm698, %v700, %v696
    %v702 = vmul.f32 %v636, %v701
    %v703 = vrcp.pop %v657
    %v704 = vmul.f32 %v657, %v703
    %v705 = vsub.f32 1.0, %v704
    %v706 = vmul.f32 %v703, %v705
    %v707 = vadd.f32 %v703, %v706
    %vm708 = vweird.f32 %v657
    %vm709 = vweird.f32 %v703
    %vm710 = vmor %vm708, %vm709
    %v711 = vsel %vm710, %v703, %v707
    %v712 = vand.u32 2147483647, %v657
    %vm713 = vcmp.eq.f32.partialorder %v712, 8.507059e+37
    %v714 = vand.u32 %v657, 2147483648
    %v715 = vor.u32 1.1754944e-38, %v714
    %v716 = vsel %vm713, %v715, %v711
    %v717 = vmul.f32 %v638, %v716
    %v718 = vrcp.pop %v660
    %v719 = vmul.f32 %v660, %v718
    %v720 = vsub.f32 1.0, %v719
    %v721 = vmul.f32 %v718, %v720
    %v722 = vadd.f32 %v718, %v721
    %vm723 = vweird.f32 %v660
    %vm724 = vweird.f32 %v718
    %vm725 = vmor %vm723, %vm724
    %v726 = vsel %vm725, %v718, %v722
    %v727 = vand.u32 2147483647, %v660
    %vm728 = vcmp.eq.f32.partialorder %v727, 8.507059e+37
    %v729 = vand.u32 %v660, 2147483648
    %v730 = vor.u32 1.1754944e-38, %v729
    %v731 = vsel %vm728, %v730, %v726
    %v732 = vmul.f32 %v640, %v731
    %v733 = vrcp.pop %v663
    %v734 = vmul.f32 %v663, %v733
    %v735 = vsub.f32 1.0, %v734
    %v736 = vmul.f32 %v733, %v735
    %v737 = vadd.f32 %v733, %v736
    %vm738 = vweird.f32 %v663
    %vm739 = vweird.f32 %v733
    %vm740 = vmor %vm738, %vm739
    %v741 = vsel %vm740, %v733, %v737
    %v742 = vand.u32 2147483647, %v663
    %vm743 = vcmp.eq.f32.partialorder %v742, 8.507059e+37
    %v744 = vand.u32 %v663, 2147483648
    %v745 = vor.u32 1.1754944e-38, %v744
    %v746 = vsel %vm743, %v745, %v741
    %v747 = vmul.f32 %v642, %v746
    %v748 = vrcp.pop %v666
    %v749 = vmul.f32 %v666, %v748
    %v750 = vsub.f32 1.0, %v749
    %v751 = vmul.f32 %v748, %v750
    %v752 = vadd.f32 %v748, %v751
    %vm753 = vweird.f32 %v666
    %vm754 = vweird.f32 %v748
    %vm755 = vmor %vm753, %vm754
    %v756 = vsel %vm755, %v748, %v752
    %v757 = vand.u32 2147483647, %v666
    %vm758 = vcmp.eq.f32.partialorder %v757, 8.507059e+37
    %v759 = vand.u32 %v666, 2147483648
    %v760 = vor.u32 1.1754944e-38, %v759
    %v761 = vsel %vm758, %v760, %v756
    %v762 = vmul.f32 %v644, %v761
    %v763 = vrcp.pop %v669
    %v764 = vmul.f32 %v669, %v763
    %v765 = vsub.f32 1.0, %v764
    %v766 = vmul.f32 %v763, %v765
    %v767 = vadd.f32 %v763, %v766
    %vm768 = vweird.f32 %v669
    %vm769 = vweird.f32 %v763
    %vm770 = vmor %vm768, %vm769
    %v771 = vsel %vm770, %v763, %v767
    %v772 = vand.u32 2147483647, %v669
    %vm773 = vcmp.eq.f32.partialorder %v772, 8.507059e+37
    %v774 = vand.u32 %v669, 2147483648
    %v775 = vor.u32 1.1754944e-38, %v774
    %v776 = vsel %vm773, %v775, %v771
    %v777 = vmul.f32 %v646, %v776
    %v778 = vrcp.pop %v672
    %v779 = vmul.f32 %v672, %v778
    %v780 = vsub.f32 1.0, %v779
    %v781 = vmul.f32 %v778, %v780
    %v782 = vadd.f32 %v778, %v781
    %vm783 = vweird.f32 %v672
    %vm784 = vweird.f32 %v778
    %vm785 = vmor %vm783, %vm784
    %v786 = vsel %vm785, %v778, %v782
    %v787 = vand.u32 2147483647, %v672
    %vm788 = vcmp.eq.f32.partialorder %v787, 8.507059e+37
    %v789 = vand.u32 %v672, 2147483648
    %v790 = vor.u32 1.1754944e-38, %v789
    %v791 = vsel %vm788, %v790, %v786
    %v792 = vmul.f32 %v648, %v791
    %v794 = vsel %vm600, %v687, 0
    %v797 = vsel %vm600, %v702, 0
    %799 = vmatpush.msra.mxu0 0.0
    %800 = vmatpush.msra.mxu0 0.0
    %801 = vmatpush.msra.mxu0 0.0
    %802 = vmatpush.msra.mxu0 0.0
    %803 = vmatpush.msra.mxu0 0.0
    %804 = vmatpush.msra.mxu0 0.0
    %805 = vmatpush.msra.mxu0 0.0
    %806 = vmatpush.msra.mxu0 0.0
    %807 = vmatpush.msra.mxu0 0.0
    %808 = vmatpush.msra.mxu0 0.0
    %809 = vmatpush.msra.mxu0 0.0
    %810 = vmatpush.msra.mxu0 0.0
    %811 = vmatpush.msra.mxu0 0.0
    %812 = vmatpush.msra.mxu0 0.0
    %813 = vmatpush.msra.mxu0 %v379
    %814 = vmatpush.msra.mxu0 %v376
    %815 = vmatmul.f32.gmra.mxu0 %v794
    %v816 = vpop.f32.mrf.mxu0
    %v817 = vadd.f32 0.0, %v816
    %818 = vmatmul.f32.gmra.mxu0 %v797
    %v819 = vpop.f32.mrf.mxu0
    %v820 = vadd.f32 0.0, %v819
    %821 = vdwg.mxu0
    %v823 = vsel %vm600, %v717, 0
    %v826 = vsel %vm600, %v732, 0
    %828 = vmatpush.msra.mxu0 0.0
    %829 = vmatpush.msra.mxu0 0.0
    %830 = vmatpush.msra.mxu0 0.0
    %831 = vmatpush.msra.mxu0 0.0
    %832 = vmatpush.msra.mxu0 0.0
    %833 = vmatpush.msra.mxu0 0.0
    %834 = vmatpush.msra.mxu0 0.0
    %835 = vmatpush.msra.mxu0 0.0
    %836 = vmatpush.msra.mxu0 0.0
    %837 = vmatpush.msra.mxu0 0.0
    %838 = vmatpush.msra.mxu0 0.0
    %839 = vmatpush.msra.mxu0 0.0
    %840 = vmatpush.msra.mxu0 0.0
    %841 = vmatpush.msra.mxu0 0.0
    %842 = vmatpush.msra.mxu0 %v405
    %843 = vmatpush.msra.mxu0 %v402
    %844 = vmatmul.f32.gmra.mxu0 %v823
    %v845 = vpop.f32.mrf.mxu0
    %v846 = vadd.f32 0.0, %v845
    %847 = vmatmul.f32.gmra.mxu0 %v826
    %v848 = vpop.f32.mrf.mxu0
    %v849 = vadd.f32 0.0, %v848
    %850 = vdwg.mxu0
    %v852 = vsel %vm600, %v747, 0
    %v855 = vsel %vm600, %v762, 0
    %857 = vmatpush.msra.mxu0 0.0
    %858 = vmatpush.msra.mxu0 0.0
    %859 = vmatpush.msra.mxu0 0.0
    %860 = vmatpush.msra.mxu0 0.0
    %861 = vmatpush.msra.mxu0 0.0
    %862 = vmatpush.msra.mxu0 0.0
    %863 = vmatpush.msra.mxu0 0.0
    %864 = vmatpush.msra.mxu0 0.0
    %865 = vmatpush.msra.mxu0 0.0
    %866 = vmatpush.msra.mxu0 0.0
    %867 = vmatpush.msra.mxu0 0.0
    %868 = vmatpush.msra.mxu0 0.0
    %869 = vmatpush.msra.mxu0 0.0
    %870 = vmatpush.msra.mxu0 0.0
    %871 = vmatpush.msra.mxu0 %v431
    %872 = vmatpush.msra.mxu0 %v428
    %873 = vmatmul.f32.gmra.mxu0 %v852
    %v874 = vpop.f32.mrf.mxu0
    %v875 = vadd.f32 0.0, %v874
    %876 = vmatmul.f32.gmra.mxu0 %v855
    %v877 = vpop.f32.mrf.mxu0
    %v878 = vadd.f32 0.0, %v877
    %879 = vdwg.mxu0
    %v881 = vsel %vm600, %v777, 0
    %v884 = vsel %vm600, %v792, 0
    %886 = vmatpush.msra.mxu0 0.0
    %887 = vmatpush.msra.mxu0 0.0
    %888 = vmatpush.msra.mxu0 0.0
    %889 = vmatpush.msra.mxu0 0.0
    %890 = vmatpush.msra.mxu0 0.0
    %891 = vmatpush.msra.mxu0 0.0
    %892 = vmatpush.msra.mxu0 0.0
    %893 = vmatpush.msra.mxu0 0.0
    %894 = vmatpush.msra.mxu0 0.0
    %895 = vmatpush.msra.mxu0 0.0
    %896 = vmatpush.msra.mxu0 0.0
    %897 = vmatpush.msra.mxu0 0.0
    %898 = vmatpush.msra.mxu0 0.0
    %899 = vmatpush.msra.mxu0 0.0
    %900 = vmatpush.msra.mxu0 %v457
    %901 = vmatpush.msra.mxu0 %v454
    %902 = vmatmul.f32.gmra.mxu0 %v881
    %v903 = vpop.f32.mrf.mxu0
    %v904 = vadd.f32 0.0, %v903
    %905 = vmatmul.f32.gmra.mxu0 %v884
    %v906 = vpop.f32.mrf.mxu0
    %v907 = vadd.f32 0.0, %v906
    %908 = vdwg.mxu0
    %v909 = vld [vmem:[%s3] sm:$0xff]
    %v910 = vld [vmem:[%s3 + $0x8] sm:$0xff]
    %v911 = vld [vmem:[%s3 + $0x10] sm:$0xff]
    %v912 = vld [vmem:[%s3 + $0x18] sm:$0xff]
    %v914 = vsel %vm459, %v817, 0
    %v917 = vsel %vm459, %v820, 0
    %919 = vmatpush.msra.mxu0 0.0
    %920 = vmatpush.msra.mxu0 0.0
    %921 = vmatpush.msra.mxu0 0.0
    %922 = vmatpush.msra.mxu0 0.0
    %923 = vmatpush.msra.mxu0 0.0
    %924 = vmatpush.msra.mxu0 0.0
    %925 = vmatpush.msra.mxu0 0.0
    %926 = vmatpush.msra.mxu0 0.0
    %927 = vmatpush.msra.mxu0 0.0
    %928 = vmatpush.msra.mxu0 0.0
    %929 = vmatpush.msra.mxu0 0.0
    %930 = vmatpush.msra.mxu0 0.0
    %931 = vmatpush.msra.mxu0 0.0
    %932 = vmatpush.msra.mxu0 0.0
    %933 = vmatpush.msra.mxu0 0.0
    %934 = vmatpush.msra.mxu0 %v909
    %935 = vmatmul.f32.gmra.mxu0 %v914
    %v936 = vpop.f32.mrf.mxu0
    %v937 = vadd.f32 0.0, %v936
    %938 = vmatmul.f32.gmra.mxu0 %v917
    %v939 = vpop.f32.mrf.mxu0
    %v940 = vadd.f32 0.0, %v939
    %941 = vdwg.mxu0
    %v943 = vsel %vm459, %v846, 0
    %v946 = vsel %vm459, %v849, 0
    %948 = vmatpush.msra.mxu0 0.0
    %949 = vmatpush.msra.mxu0 0.0
    %950 = vmatpush.msra.mxu0 0.0
    %951 = vmatpush.msra.mxu0 0.0
    %952 = vmatpush.msra.mxu0 0.0
    %953 = vmatpush.msra.mxu0 0.0
    %954 = vmatpush.msra.mxu0 0.0
    %955 = vmatpush.msra.mxu0 0.0
    %956 = vmatpush.msra.mxu0 0.0
    %957 = vmatpush.msra.mxu0 0.0
    %958 = vmatpush.msra.mxu0 0.0
    %959 = vmatpush.msra.mxu0 0.0
    %960 = vmatpush.msra.mxu0 0.0
    %961 = vmatpush.msra.mxu0 0.0
    %962 = vmatpush.msra.mxu0 0.0
    %963 = vmatpush.msra.mxu0 %v910
    %964 = vmatmul.f32.gmra.mxu0 %v943
    %v965 = vpop.f32.mrf.mxu0
    %v966 = vadd.f32 0.0, %v965
    %967 = vmatmul.f32.gmra.mxu0 %v946
    %v968 = vpop.f32.mrf.mxu0
    %v969 = vadd.f32 0.0, %v968
    %970 = vdwg.mxu0
    %v972 = vsel %vm459, %v875, 0
    %v975 = vsel %vm459, %v878, 0
    %977 = vmatpush.msra.mxu0 0.0
    %978 = vmatpush.msra.mxu0 0.0
    %979 = vmatpush.msra.mxu0 0.0
    %980 = vmatpush.msra.mxu0 0.0
    %981 = vmatpush.msra.mxu0 0.0
    %982 = vmatpush.msra.mxu0 0.0
    %983 = vmatpush.msra.mxu0 0.0
    %984 = vmatpush.msra.mxu0 0.0
    %985 = vmatpush.msra.mxu0 0.0
    %986 = vmatpush.msra.mxu0 0.0
    %987 = vmatpush.msra.mxu0 0.0
    %988 = vmatpush.msra.mxu0 0.0
    %989 = vmatpush.msra.mxu0 0.0
    %990 = vmatpush.msra.mxu0 0.0
    %991 = vmatpush.msra.mxu0 0.0
    %992 = vmatpush.msra.mxu0 %v911
    %993 = vmatmul.f32.gmra.mxu0 %v972
    %v994 = vpop.f32.mrf.mxu0
    %v995 = vadd.f32 0.0, %v994
    %996 = vmatmul.f32.gmra.mxu0 %v975
    %v997 = vpop.f32.mrf.mxu0
    %v998 = vadd.f32 0.0, %v997
    %999 = vdwg.mxu0
    %v1001 = vsel %vm459, %v904, 0
    %v1004 = vsel %vm459, %v907, 0
    %1006 = vmatpush.msra.mxu0 0.0
    %1007 = vmatpush.msra.mxu0 0.0
    %1008 = vmatpush.msra.mxu0 0.0
    %1009 = vmatpush.msra.mxu0 0.0
    %1010 = vmatpush.msra.mxu0 0.0
    %1011 = vmatpush.msra.mxu0 0.0
    %1012 = vmatpush.msra.mxu0 0.0
    %1013 = vmatpush.msra.mxu0 0.0
    %1014 = vmatpush.msra.mxu0 0.0
    %1015 = vmatpush.msra.mxu0 0.0
    %1016 = vmatpush.msra.mxu0 0.0
    %1017 = vmatpush.msra.mxu0 0.0
    %1018 = vmatpush.msra.mxu0 0.0
    %1019 = vmatpush.msra.mxu0 0.0
    %1020 = vmatpush.msra.mxu0 0.0
    %1021 = vmatpush.msra.mxu0 %v912
    %1022 = vmatmul.f32.gmra.mxu0 %v1001
    %v1023 = vpop.f32.mrf.mxu0
    %v1024 = vadd.f32 0.0, %v1023
    %1025 = vmatmul.f32.gmra.mxu0 %v1004
    %v1026 = vpop.f32.mrf.mxu0
    %v1027 = vadd.f32 0.0, %v1026
    %1028 = vdwg.mxu0
    %v1029 = vsel %vm39, %v937, 0.0
    %v1030 = vsel %vm39, %v966, 0.0
    %v1031 = vadd.f32 %v1029, %v1030
    %v1032 = vsel %vm39, %v995, 0.0
    %v1033 = vadd.f32 %v1031, %v1032
    %v1034 = vsel %vm39, %v1024, 0.0
    %v1035 = vadd.f32 %v1033, %v1034
    %v1036 = vsel %vm39, %v940, 0.0
    %v1037 = vsel %vm39, %v969, 0.0
    %v1038 = vadd.f32 %v1036, %v1037
    %v1039 = vsel %vm39, %v998, 0.0
    %v1040 = vadd.f32 %v1038, %v1039
    %v1041 = vsel %vm39, %v1027, 0.0
    %v1042 = vadd.f32 %v1040, %v1041
    %v1043 = vperm.slane %v37, 2
    %v1044 = vadd.f32 %v1035, %v1043
    %v1045 = vadd.f32 %v1042, %v1043
    %v1046 = vadd.f32 %v33, %v1044
    %v1047 = vadd.f32 %v34, %v1045
    %v1048 = vsel %vm39, %v1046, 0.0
    %1049 = vadd.xlane.f32.xlu0 %v1048
    %v1050 = vpop.xlane.xlu0 %1049
    %v1051 = vsel %vm39, %v1047, 0.0
    %1052 = vadd.xlane.f32.xlu0 %v1051
    %v1053 = vpop.xlane.xlu0 %1052
    %v1054 = vmul.f32 %v1050, %v52
    %v1055 = vmul.f32 %v1053, %v52
    %v1056 = vsub.f32 %v1046, %v1054
    %v1057 = vsub.f32 %v1047, %v1055
    %v1058 = vmul.f32 %v1056, %v1056
    %v1059 = vmul.f32 %v1057, %v1057
    %v1060 = vsel %vm39, %v1058, 0.0
    %1061 = vadd.xlane.f32.xlu0 %v1060
    %v1062 = vpop.xlane.xlu0 %1061
    %v1063 = vsel %vm39, %v1059, 0.0
    %1064 = vadd.xlane.f32.xlu0 %v1063
    %v1065 = vpop.xlane.xlu0 %1064
    %v1066 = vmul.f32 %v1062, %v52
    %v1067 = vmul.f32 %v1065, %v52
    %v1068 = vrsqrt.pop %v1066
    %v1069 = vmul.f32 %v1068, %v1066
    %v1070 = vmul.f32 %v1069, %v1068
    %v1071 = vmul.f32 0.5, %v1070
    %v1072 = vsub.f32 1.5, %v1071
    %v1073 = vmul.f32 %v1068, %v1072
    %v1074 = vmul.f32 %v1066, %v1073
    %vm1075 = vcmp.eq.f32.partialorder %v1066, inf
    %v1076 = vsel %vm1075, %v1066, %v1074
    %vm1077 = vcmp.eq.f32.partialorder %v1066, 0.0
    %v1078 = vand.u32 %v1066, 2147483648
    %v1079 = vsel %vm1077, %v1078, %v1076
    %v1080 = vrsqrt.pop %v1067
    %v1081 = vmul.f32 %v1080, %v1067
    %v1082 = vmul.f32 %v1081, %v1080
    %v1083 = vmul.f32 0.5, %v1082
    %v1084 = vsub.f32 1.5, %v1083
    %v1085 = vmul.f32 %v1080, %v1084
    %v1086 = vmul.f32 %v1067, %v1085
    %vm1087 = vcmp.eq.f32.partialorder %v1067, inf
    %v1088 = vsel %vm1087, %v1067, %v1086
    %vm1089 = vcmp.eq.f32.partialorder %v1067, 0.0
    %v1090 = vand.u32 %v1067, 2147483648
    %v1091 = vsel %vm1089, %v1090, %v1088
    %v1092 = vadd.f32 %v1079, 1e-05
    %v1093 = vadd.f32 %v1091, 1e-05
    %v1094 = vrcp.pop %v1092
    %v1095 = vmul.f32 %v1092, %v1094
    %v1096 = vsub.f32 1.0, %v1095
    %v1097 = vmul.f32 %v1094, %v1096
    %v1098 = vadd.f32 %v1094, %v1097
    %vm1099 = vweird.f32 %v1092
    %vm1100 = vweird.f32 %v1094
    %vm1101 = vmor %vm1099, %vm1100
    %v1102 = vsel %vm1101, %v1094, %v1098
    %v1103 = vand.u32 2147483647, %v1092
    %vm1104 = vcmp.eq.f32.partialorder %v1103, 8.507059e+37
    %v1105 = vand.u32 %v1092, 2147483648
    %v1106 = vor.u32 1.1754944e-38, %v1105
    %v1107 = vsel %vm1104, %v1106, %v1102
    %v1108 = vmul.f32 %v1056, %v1107
    %v1109 = vrcp.pop %v1093
    %v1110 = vmul.f32 %v1093, %v1109
    %v1111 = vsub.f32 1.0, %v1110
    %v1112 = vmul.f32 %v1109, %v1111
    %v1113 = vadd.f32 %v1109, %v1112
    %vm1114 = vweird.f32 %v1093
    %vm1115 = vweird.f32 %v1109
    %vm1116 = vmor %vm1114, %vm1115
    %v1117 = vsel %vm1116, %v1109, %v1113
    %v1118 = vand.u32 2147483647, %v1093
    %vm1119 = vcmp.eq.f32.partialorder %v1118, 8.507059e+37
    %v1120 = vand.u32 %v1093, 2147483648
    %v1121 = vor.u32 1.1754944e-38, %v1120
    %v1122 = vsel %vm1119, %v1121, %v1117
    %v1123 = vmul.f32 %v1057, %v1122
    %v1124 = vperm.slane %v37, 3
    %v1125 = vmul.f32 %v1108, %v1124
    %v1126 = vmul.f32 %v1123, %v1124
    %v1127 = vperm.slane %v37, 4
    %v1128 = vadd.f32 %v1125, %v1127
    %v1129 = vadd.f32 %v1126, %v1127
    %v1130 = vld [vmem:[%s4] sm:$0xff]
    %v1131 = vld [vmem:[%s4 + $0x8] sm:$0xff]
    %v1132 = vld [vmem:[%s4 + $0x10] sm:$0xff]
    %v1133 = vld [vmem:[%s4 + $0x18] sm:$0xff]
    %v1135 = vperm.slane %v38, 0
    %v1138 = vsel %vm39, %v1128, 0
    %v1141 = vsel %vm39, %v1129, 0
    %1143 = vmatpush.msra.mxu0 0.0
    %1144 = vmatpush.msra.mxu0 0.0
    %1145 = vmatpush.msra.mxu0 0.0
    %1146 = vmatpush.msra.mxu0 0.0
    %1147 = vmatpush.msra.mxu0 0.0
    %1148 = vmatpush.msra.mxu0 0.0
    %1149 = vmatpush.msra.mxu0 0.0
    %1150 = vmatpush.msra.mxu0 0.0
    %1151 = vmatpush.msra.mxu0 0.0
    %1152 = vmatpush.msra.mxu0 0.0
    %1153 = vmatpush.msra.mxu0 0.0
    %1154 = vmatpush.msra.mxu0 0.0
    %1155 = vmatpush.msra.mxu0 %v1133
    %1156 = vmatpush.msra.mxu0 %v1132
    %1157 = vmatpush.msra.mxu0 %v1131
    %1158 = vmatpush.msra.mxu0 %v1130
    %1159 = vmatmul.f32.gmra.mxu0 %v1138
    %v1160 = vpop.f32.mrf.mxu0
    %v1161 = vadd.f32 %v1135, %v1160
    %1162 = vmatmul.f32.gmra.mxu0 %v1141
    %v1163 = vpop.f32.mrf.mxu0
    %v1164 = vadd.f32 %v1135, %v1163
    %1165 = vdwg.mxu0
    %v1166 = vmul.f32 %v1161, 0.5
    %v1167 = vmul.f32 %v1164, 0.5
    %v1168 = vmul.f32 %v1161, 0.044715
    %v1169 = vmul.f32 %v1164, 0.044715
    %v1170 = vmul.f32 %v1168, %v1161
    %v1171 = vmul.f32 %v1169, %v1164
    %v1172 = vmul.f32 %v1170, %v1161
    %v1173 = vmul.f32 %v1171, %v1164
    %v1174 = vadd.f32 %v1161, %v1172
    %v1175 = vadd.f32 %v1164, %v1173
    %v1176 = vmul.f32 %v1174, 0.797885
    %v1177 = vmul.f32 %v1175, 0.797885
    %v1178 = vtanh.pop %v1176
    %v1179 = vtanh.pop %v1177
    %v1180 = vadd.f32 %v1178, 1.0
    %v1181 = vadd.f32 %v1179, 1.0
    %v1182 = vmul.f32 %v1166, %v1180
    %v1183 = vmul.f32 %v1167, %v1181
    %v1184 = vld [vmem:[%s5] sm:$0xff]
    %v1185 = vld [vmem:[%s5 + $0x8] sm:$0xff]
    %v1186 = vld [vmem:[%s5 + $0x10] sm:$0xff]
    %v1187 = vld [vmem:[%s5 + $0x18] sm:$0xff]
    %v1188 = vld [vmem:[%s5 + $0x20] sm:$0xff]
    %v1189 = vld [vmem:[%s5 + $0x28] sm:$0xff]
    %v1190 = vld [vmem:[%s5 + $0x30] sm:$0xff]
    %v1191 = vld [vmem:[%s5 + $0x38] sm:$0xff]
    %v1192 = vperm.slane %v37, 5
    %vm1193 = vcmask 523264
    %v1195 = vsel %vm1193, %v1182, 0
    %v1198 = vsel %vm1193, %v1183, 0
    %1200 = vmatpush.msra.mxu0 0.0
    %1201 = vmatpush.msra.mxu0 0.0
    %1202 = vmatpush.msra.mxu0 0.0
    %1203 = vmatpush.msra.mxu0 0.0
    %1204 = vmatpush.msra.mxu0 0.0
    %1205 = vmatpush.msra.mxu0 0.0
    %1206 = vmatpush.msra.mxu0 0.0
    %1207 = vmatpush.msra.mxu0 0.0
    %1208 = vmatpush.msra.mxu0 %v1191
    %1209 = vmatpush.msra.mxu0 %v1190
    %1210 = vmatpush.msra.mxu0 %v1189
    %1211 = vmatpush.msra.mxu0 %v1188
    %1212 = vmatpush.msra.mxu0 %v1187
    %1213 = vmatpush.msra.mxu0 %v1186
    %1214 = vmatpush.msra.mxu0 %v1185
    %1215 = vmatpush.msra.mxu0 %v1184
    %1216 = vmatmul.f32.gmra.mxu0 %v1195
    %v1217 = vpop.f32.mrf.mxu0
    %v1218 = vadd.f32 %v1192, %v1217
    %1219 = vmatmul.f32.gmra.mxu0 %v1198
    %v1220 = vpop.f32.mrf.mxu0
    %v1221 = vadd.f32 %v1192, %v1220
    %1222 = vdwg.mxu0
    %v1223 = vadd.f32 %v1046, %v1218
    %v1224 = vadd.f32 %v1047, %v1221
    %s1225 = scalar_lea.vmem %s6, 8
    %v1226 = vld [vmem:[%s1225] sm:$0x3f]
    %s1227 = scalar_lea.vmem %s7, 1
    %v1228 = vld [vmem:[%s1227] sm:$0x1]
    %v1229 = vsel %vm39, %v1223, 0.0
    %1230 = vadd.xlane.f32.xlu0 %v1229
    %v1231 = vpop.xlane.xlu0 %1230
    %v1232 = vsel %vm39, %v1224, 0.0
    %1233 = vadd.xlane.f32.xlu0 %v1232
    %v1234 = vpop.xlane.xlu0 %1233
    %v1235 = vmul.f32 %v1231, %v52
    %v1236 = vmul.f32 %v1234, %v52
    %v1237 = vsub.f32 %v1223, %v1235
    %v1238 = vsub.f32 %v1224, %v1236
    %v1239 = vmul.f32 %v1237, %v1237
    %v1240 = vmul.f32 %v1238, %v1238
    %v1241 = vsel %vm39, %v1239, 0.0
    %1242 = vadd.xlane.f32.xlu0 %v1241
    %v1243 = vpop.xlane.xlu0 %1242
    %v1244 = vsel %vm39, %v1240, 0.0
    %1245 = vadd.xlane.f32.xlu0 %v1244
    %v1246 = vpop.xlane.xlu0 %1245
    %v1247 = vmul.f32 %v1243, %v52
    %v1248 = vmul.f32 %v1246, %v52
    %v1249 = vrsqrt.pop %v1247
    %v1250 = vmul.f32 %v1249, %v1247
    %v1251 = vmul.f32 %v1250, %v1249
    %v1252 = vmul.f32 0.5, %v1251
    %v1253 = vsub.f32 1.5, %v1252
    %v1254 = vmul.f32 %v1249, %v1253
    %v1255 = vmul.f32 %v1247, %v1254
    %vm1256 = vcmp.eq.f32.partialorder %v1247, inf
    %v1257 = vsel %vm1256, %v1247, %v1255
    %vm1258 = vcmp.eq.f32.partialorder %v1247, 0.0
    %v1259 = vand.u32 %v1247, 2147483648
    %v1260 = vsel %vm1258, %v1259, %v1257
    %v1261 = vrsqrt.pop %v1248
    %v1262 = vmul.f32 %v1261, %v1248
    %v1263 = vmul.f32 %v1262, %v1261
    %v1264 = vmul.f32 0.5, %v1263
    %v1265 = vsub.f32 1.5, %v1264
    %v1266 = vmul.f32 %v1261, %v1265
    %v1267 = vmul.f32 %v1248, %v1266
    %vm1268 = vcmp.eq.f32.partialorder %v1248, inf
    %v1269 = vsel %vm1268, %v1248, %v1267
    %vm1270 = vcmp.eq.f32.partialorder %v1248, 0.0
    %v1271 = vand.u32 %v1248, 2147483648
    %v1272 = vsel %vm1270, %v1271, %v1269
    %v1273 = vadd.f32 %v1260, 1e-05
    %v1274 = vadd.f32 %v1272, 1e-05
    %v1275 = vrcp.pop %v1273
    %v1276 = vmul.f32 %v1273, %v1275
    %v1277 = vsub.f32 1.0, %v1276
    %v1278 = vmul.f32 %v1275, %v1277
    %v1279 = vadd.f32 %v1275, %v1278
    %vm1280 = vweird.f32 %v1273
    %vm1281 = vweird.f32 %v1275
    %vm1282 = vmor %vm1280, %vm1281
    %v1283 = vsel %vm1282, %v1275, %v1279
    %v1284 = vand.u32 2147483647, %v1273
    %vm1285 = vcmp.eq.f32.partialorder %v1284, 8.507059e+37
    %v1286 = vand.u32 %v1273, 2147483648
    %v1287 = vor.u32 1.1754944e-38, %v1286
    %v1288 = vsel %vm1285, %v1287, %v1283
    %v1289 = vmul.f32 %v1237, %v1288
    %v1290 = vrcp.pop %v1274
    %v1291 = vmul.f32 %v1274, %v1290
    %v1292 = vsub.f32 1.0, %v1291
    %v1293 = vmul.f32 %v1290, %v1292
    %v1294 = vadd.f32 %v1290, %v1293
    %vm1295 = vweird.f32 %v1274
    %vm1296 = vweird.f32 %v1290
    %vm1297 = vmor %vm1295, %vm1296
    %v1298 = vsel %vm1297, %v1290, %v1294
    %v1299 = vand.u32 2147483647, %v1274
    %vm1300 = vcmp.eq.f32.partialorder %v1299, 8.507059e+37
    %v1301 = vand.u32 %v1274, 2147483648
    %v1302 = vor.u32 1.1754944e-38, %v1301
    %v1303 = vsel %vm1300, %v1302, %v1298
    %v1304 = vmul.f32 %v1238, %v1303
    %v1305 = vperm.slane %v1226, 0
    %v1306 = vmul.f32 %v1289, %v1305
    %v1307 = vmul.f32 %v1304, %v1305
    %v1308 = vperm.slane %v1226, 1
    %v1309 = vadd.f32 %v1306, %v1308
    %v1310 = vadd.f32 %v1307, %v1308
    %s1311 = scalar_lea.vmem %s2, 96
    %v1312 = vld [vmem:[%s1311] sm:$0xff]
    %v1313 = vld [vmem:[%s1311 + $0x8] sm:$0xff]
    %v1314 = vld [vmem:[%s1311 + $0x10] sm:$0xff]
    %v1315 = vld [vmem:[%s1311 + $0x18] sm:$0xff]
    %v1316 = vld [vmem:[%s1311 + $0x20] sm:$0xff]
    %v1317 = vld [vmem:[%s1311 + $0x28] sm:$0xff]
    %v1318 = vld [vmem:[%s1311 + $0x30] sm:$0xff]
    %v1319 = vld [vmem:[%s1311 + $0x38] sm:$0xff]
    %v1320 = vld [vmem:[%s1311 + $0x40] sm:$0xff]
    %v1321 = vld [vmem:[%s1311 + $0x48] sm:$0xff]
    %v1322 = vld [vmem:[%s1311 + $0x50] sm:$0xff]
    %v1323 = vld [vmem:[%s1311 + $0x58] sm:$0xff]
    %v1325 = vsel %vm39, %v1309, 0
    %v1328 = vsel %vm39, %v1310, 0
    %v1331 = vsel %vm39, %v1312, 0
    %1333 = vmatpush.xpose.msra.mxu0 0.0
    %1334 = vmatpush.xpose.msra.mxu0 0.0
    %1335 = vmatpush.xpose.msra.mxu0 0.0
    %1336 = vmatpush.xpose.msra.mxu0 0.0
    %1337 = vmatpush.xpose.msra.mxu0 0.0
    %1338 = vmatpush.xpose.msra.mxu0 0.0
    %1339 = vmatpush.xpose.msra.mxu0 0.0
    %1340 = vmatpush.xpose.msra.mxu0 0.0
    %1341 = vmatpush.xpose.msra.mxu0 0.0
    %1342 = vmatpush.xpose.msra.mxu0 0.0
    %1343 = vmatpush.xpose.msra.mxu0 0.0
    %1344 = vmatpush.xpose.msra.mxu0 0.0
    %1345 = vmatpush.xpose.msra.mxu0 0.0
    %1346 = vmatpush.xpose.msra.mxu0 0.0
    %1347 = vmatpush.xpose.msra.mxu0 0.0
    %1348 = vmatpush.xpose.msra.mxu0 %v1331
    %1349 = vmatmul.f32.gmra.mxu0 %v1325
    %v1350 = vpop.f32.mrf.mxu0
    %v1351 = vadd.f32 0.0, %v1350
    %1352 = vmatmul.f32.gmra.mxu0 %v1328
    %v1353 = vpop.f32.mrf.mxu0
    %v1354 = vadd.f32 0.0, %v1353
    %1355 = vdwg.mxu0
    %v1357 = vsel %vm39, %v1313, 0
    %1359 = vmatpush.xpose.msra.mxu0 0.0
    %1360 = vmatpush.xpose.msra.mxu0 0.0
    %1361 = vmatpush.xpose.msra.mxu0 0.0
    %1362 = vmatpush.xpose.msra.mxu0 0.0
    %1363 = vmatpush.xpose.msra.mxu0 0.0
    %1364 = vmatpush.xpose.msra.mxu0 0.0
    %1365 = vmatpush.xpose.msra.mxu0 0.0
    %1366 = vmatpush.xpose.msra.mxu0 0.0
    %1367 = vmatpush.xpose.msra.mxu0 0.0
    %1368 = vmatpush.xpose.msra.mxu0 0.0
    %1369 = vmatpush.xpose.msra.mxu0 0.0
    %1370 = vmatpush.xpose.msra.mxu0 0.0
    %1371 = vmatpush.xpose.msra.mxu0 0.0
    %1372 = vmatpush.xpose.msra.mxu0 0.0
    %1373 = vmatpush.xpose.msra.mxu0 0.0
    %1374 = vmatpush.xpose.msra.mxu0 %v1357
    %1375 = vmatmul.f32.gmra.mxu0 %v1325
    %v1376 = vpop.f32.mrf.mxu0
    %v1377 = vadd.f32 0.0, %v1376
    %1378 = vmatmul.f32.gmra.mxu0 %v1328
    %v1379 = vpop.f32.mrf.mxu0
    %v1380 = vadd.f32 0.0, %v1379
    %1381 = vdwg.mxu0
    %v1383 = vsel %vm39, %v1314, 0
    %1385 = vmatpush.xpose.msra.mxu0 0.0
    %1386 = vmatpush.xpose.msra.mxu0 0.0
    %1387 = vmatpush.xpose.msra.mxu0 0.0
    %1388 = vmatpush.xpose.msra.mxu0 0.0
    %1389 = vmatpush.xpose.msra.mxu0 0.0
    %1390 = vmatpush.xpose.msra.mxu0 0.0
    %1391 = vmatpush.xpose.msra.mxu0 0.0
    %1392 = vmatpush.xpose.msra.mxu0 0.0
    %1393 = vmatpush.xpose.msra.mxu0 0.0
    %1394 = vmatpush.xpose.msra.mxu0 0.0
    %1395 = vmatpush.xpose.msra.mxu0 0.0
    %1396 = vmatpush.xpose.msra.mxu0 0.0
    %1397 = vmatpush.xpose.msra.mxu0 0.0
    %1398 = vmatpush.xpose.msra.mxu0 0.0
    %1399 = vmatpush.xpose.msra.mxu0 0.0
    %1400 = vmatpush.xpose.msra.mxu0 %v1383
    %1401 = vmatmul.f32.gmra.mxu0 %v1325
    %v1402 = vpop.f32.mrf.mxu0
    %v1403 = vadd.f32 0.0, %v1402
    %1404 = vmatmul.f32.gmra.mxu0 %v1328
    %v1405 = vpop.f32.mrf.mxu0
    %v1406 = vadd.f32 0.0, %v1405
    %1407 = vdwg.mxu0
    %v1409 = vsel %vm39, %v1315, 0
    %1411 = vmatpush.xpose.msra.mxu0 0.0
    %1412 = vmatpush.xpose.msra.mxu0 0.0
    %1413 = vmatpush.xpose.msra.mxu0 0.0
    %1414 = vmatpush.xpose.msra.mxu0 0.0
    %1415 = vmatpush.xpose.msra.mxu0 0.0
    %1416 = vmatpush.xpose.msra.mxu0 0.0
    %1417 = vmatpush.xpose.msra.mxu0 0.0
    %1418 = vmatpush.xpose.msra.mxu0 0.0
    %1419 = vmatpush.xpose.msra.mxu0 0.0
    %1420 = vmatpush.xpose.msra.mxu0 0.0
    %1421 = vmatpush.xpose.msra.mxu0 0.0
    %1422 = vmatpush.xpose.msra.mxu0 0.0
    %1423 = vmatpush.xpose.msra.mxu0 0.0
    %1424 = vmatpush.xpose.msra.mxu0 0.0
    %1425 = vmatpush.xpose.msra.mxu0 0.0
    %1426 = vmatpush.xpose.msra.mxu0 %v1409
    %1427 = vmatmul.f32.gmra.mxu0 %v1325
    %v1428 = vpop.f32.mrf.mxu0
    %v1429 = vadd.f32 0.0, %v1428
    %1430 = vmatmul.f32.gmra.mxu0 %v1328
    %v1431 = vpop.f32.mrf.mxu0
    %v1432 = vadd.f32 0.0, %v1431
    %1433 = vdwg.mxu0
    %v1435 = vsel %vm39, %v1316, 0
    %1437 = vmatpush.xpose.msra.mxu0 0.0
    %1438 = vmatpush.xpose.msra.mxu0 0.0
    %1439 = vmatpush.xpose.msra.mxu0 0.0
    %1440 = vmatpush.xpose.msra.mxu0 0.0
    %1441 = vmatpush.xpose.msra.mxu0 0.0
    %1442 = vmatpush.xpose.msra.mxu0 0.0
    %1443 = vmatpush.xpose.msra.mxu0 0.0
    %1444 = vmatpush.xpose.msra.mxu0 0.0
    %1445 = vmatpush.xpose.msra.mxu0 0.0
    %1446 = vmatpush.xpose.msra.mxu0 0.0
    %1447 = vmatpush.xpose.msra.mxu0 0.0
    %1448 = vmatpush.xpose.msra.mxu0 0.0
    %1449 = vmatpush.xpose.msra.mxu0 0.0
    %1450 = vmatpush.xpose.msra.mxu0 0.0
    %1451 = vmatpush.xpose.msra.mxu0 0.0
    %1452 = vmatpush.xpose.msra.mxu0 %v1435
    %1453 = vmatmul.f32.gmra.mxu0 %v1325
    %v1454 = vpop.f32.mrf.mxu0
    %v1455 = vadd.f32 0.0, %v1454
    %1456 = vmatmul.f32.gmra.mxu0 %v1328
    %v1457 = vpop.f32.mrf.mxu0
    %v1458 = vadd.f32 0.0, %v1457
    %1459 = vdwg.mxu0
    %v1461 = vsel %vm39, %v1317, 0
    %1463 = vmatpush.xpose.msra.mxu0 0.0
    %1464 = vmatpush.xpose.msra.mxu0 0.0
    %1465 = vmatpush.xpose.msra.mxu0 0.0
    %1466 = vmatpush.xpose.msra.mxu0 0.0
    %1467 = vmatpush.xpose.msra.mxu0 0.0
    %1468 = vmatpush.xpose.msra.mxu0 0.0
    %1469 = vmatpush.xpose.msra.mxu0 0.0
    %1470 = vmatpush.xpose.msra.mxu0 0.0
    %1471 = vmatpush.xpose.msra.mxu0 0.0
    %1472 = vmatpush.xpose.msra.mxu0 0.0
    %1473 = vmatpush.xpose.msra.mxu0 0.0
    %1474 = vmatpush.xpose.msra.mxu0 0.0
    %1475 = vmatpush.xpose.msra.mxu0 0.0
    %1476 = vmatpush.xpose.msra.mxu0 0.0
    %1477 = vmatpush.xpose.msra.mxu0 0.0
    %1478 = vmatpush.xpose.msra.mxu0 %v1461
    %1479 = vmatmul.f32.gmra.mxu0 %v1325
    %v1480 = vpop.f32.mrf.mxu0
    %v1481 = vadd.f32 0.0, %v1480
    %1482 = vmatmul.f32.gmra.mxu0 %v1328
    %v1483 = vpop.f32.mrf.mxu0
    %v1484 = vadd.f32 0.0, %v1483
    %1485 = vdwg.mxu0
    %v1487 = vsel %vm39, %v1318, 0
    %1489 = vmatpush.xpose.msra.mxu0 0.0
    %1490 = vmatpush.xpose.msra.mxu0 0.0
    %1491 = vmatpush.xpose.msra.mxu0 0.0
    %1492 = vmatpush.xpose.msra.mxu0 0.0
    %1493 = vmatpush.xpose.msra.mxu0 0.0
    %1494 = vmatpush.xpose.msra.mxu0 0.0
    %1495 = vmatpush.xpose.msra.mxu0 0.0
    %1496 = vmatpush.xpose.msra.mxu0 0.0
    %1497 = vmatpush.xpose.msra.mxu0 0.0
    %1498 = vmatpush.xpose.msra.mxu0 0.0
    %1499 = vmatpush.xpose.msra.mxu0 0.0
    %1500 = vmatpush.xpose.msra.mxu0 0.0
    %1501 = vmatpush.xpose.msra.mxu0 0.0
    %1502 = vmatpush.xpose.msra.mxu0 0.0
    %1503 = vmatpush.xpose.msra.mxu0 0.0
    %1504 = vmatpush.xpose.msra.mxu0 %v1487
    %1505 = vmatmul.f32.gmra.mxu0 %v1325
    %v1506 = vpop.f32.mrf.mxu0
    %v1507 = vadd.f32 0.0, %v1506
    %1508 = vmatmul.f32.gmra.mxu0 %v1328
    %v1509 = vpop.f32.mrf.mxu0
    %v1510 = vadd.f32 0.0, %v1509
    %1511 = vdwg.mxu0
    %v1513 = vsel %vm39, %v1319, 0
    %1515 = vmatpush.xpose.msra.mxu0 0.0
    %1516 = vmatpush.xpose.msra.mxu0 0.0
    %1517 = vmatpush.xpose.msra.mxu0 0.0
    %1518 = vmatpush.xpose.msra.mxu0 0.0
    %1519 = vmatpush.xpose.msra.mxu0 0.0
    %1520 = vmatpush.xpose.msra.mxu0 0.0
    %1521 = vmatpush.xpose.msra.mxu0 0.0
    %1522 = vmatpush.xpose.msra.mxu0 0.0
    %1523 = vmatpush.xpose.msra.mxu0 0.0
    %1524 = vmatpush.xpose.msra.mxu0 0.0
    %1525 = vmatpush.xpose.msra.mxu0 0.0
    %1526 = vmatpush.xpose.msra.mxu0 0.0
    %1527 = vmatpush.xpose.msra.mxu0 0.0
    %1528 = vmatpush.xpose.msra.mxu0 0.0
    %1529 = vmatpush.xpose.msra.mxu0 0.0
    %1530 = vmatpush.xpose.msra.mxu0 %v1513
    %1531 = vmatmul.f32.gmra.mxu0 %v1325
    %v1532 = vpop.f32.mrf.mxu0
    %v1533 = vadd.f32 0.0, %v1532
    %1534 = vmatmul.f32.gmra.mxu0 %v1328
    %v1535 = vpop.f32.mrf.mxu0
    %v1536 = vadd.f32 0.0, %v1535
    %1537 = vdwg.mxu0
    %v1539 = vsel %vm39, %v1320, 0
    %1541 = vmatpush.xpose.msra.mxu0 0.0
    %1542 = vmatpush.xpose.msra.mxu0 0.0
    %1543 = vmatpush.xpose.msra.mxu0 0.0
    %1544 = vmatpush.xpose.msra.mxu0 0.0
    %1545 = vmatpush.xpose.msra.mxu0 0.0
    %1546 = vmatpush.xpose.msra.mxu0 0.0
    %1547 = vmatpush.xpose.msra.mxu0 0.0
    %1548 = vmatpush.xpose.msra.mxu0 0.0
    %1549 = vmatpush.xpose.msra.mxu0 0.0
    %1550 = vmatpush.xpose.msra.mxu0 0.0
    %1551 = vmatpush.xpose.msra.mxu0 0.0
    %1552 = vmatpush.xpose.msra.mxu0 0.0
    %1553 = vmatpush.xpose.msra.mxu0 0.0
    %1554 = vmatpush.xpose.msra.mxu0 0.0
    %1555 = vmatpush.xpose.msra.mxu0 0.0
    %1556 = vmatpush.xpose.msra.mxu0 %v1539
    %1557 = vmatmul.f32.gmra.mxu0 %v1325
    %v1558 = vpop.f32.mrf.mxu0
    %v1559 = vadd.f32 0.0, %v1558
    %1560 = vmatmul.f32.gmra.mxu0 %v1328
    %v1561 = vpop.f32.mrf.mxu0
    %v1562 = vadd.f32 0.0, %v1561
    %1563 = vdwg.mxu0
    %v1565 = vsel %vm39, %v1321, 0
    %1567 = vmatpush.xpose.msra.mxu0 0.0
    %1568 = vmatpush.xpose.msra.mxu0 0.0
    %1569 = vmatpush.xpose.msra.mxu0 0.0
    %1570 = vmatpush.xpose.msra.mxu0 0.0
    %1571 = vmatpush.xpose.msra.mxu0 0.0
    %1572 = vmatpush.xpose.msra.mxu0 0.0
    %1573 = vmatpush.xpose.msra.mxu0 0.0
    %1574 = vmatpush.xpose.msra.mxu0 0.0
    %1575 = vmatpush.xpose.msra.mxu0 0.0
    %1576 = vmatpush.xpose.msra.mxu0 0.0
    %1577 = vmatpush.xpose.msra.mxu0 0.0
    %1578 = vmatpush.xpose.msra.mxu0 0.0
    %1579 = vmatpush.xpose.msra.mxu0 0.0
    %1580 = vmatpush.xpose.msra.mxu0 0.0
    %1581 = vmatpush.xpose.msra.mxu0 0.0
    %1582 = vmatpush.xpose.msra.mxu0 %v1565
    %1583 = vmatmul.f32.gmra.mxu0 %v1325
    %v1584 = vpop.f32.mrf.mxu0
    %v1585 = vadd.f32 0.0, %v1584
    %1586 = vmatmul.f32.gmra.mxu0 %v1328
    %v1587 = vpop.f32.mrf.mxu0
    %v1588 = vadd.f32 0.0, %v1587
    %1589 = vdwg.mxu0
    %v1591 = vsel %vm39, %v1322, 0
    %1593 = vmatpush.xpose.msra.mxu0 0.0
    %1594 = vmatpush.xpose.msra.mxu0 0.0
    %1595 = vmatpush.xpose.msra.mxu0 0.0
    %1596 = vmatpush.xpose.msra.mxu0 0.0
    %1597 = vmatpush.xpose.msra.mxu0 0.0
    %1598 = vmatpush.xpose.msra.mxu0 0.0
    %1599 = vmatpush.xpose.msra.mxu0 0.0
    %1600 = vmatpush.xpose.msra.mxu0 0.0
    %1601 = vmatpush.xpose.msra.mxu0 0.0
    %1602 = vmatpush.xpose.msra.mxu0 0.0
    %1603 = vmatpush.xpose.msra.mxu0 0.0
    %1604 = vmatpush.xpose.msra.mxu0 0.0
    %1605 = vmatpush.xpose.msra.mxu0 0.0
    %1606 = vmatpush.xpose.msra.mxu0 0.0
    %1607 = vmatpush.xpose.msra.mxu0 0.0
    %1608 = vmatpush.xpose.msra.mxu0 %v1591
    %1609 = vmatmul.f32.gmra.mxu0 %v1325
    %v1610 = vpop.f32.mrf.mxu0
    %v1611 = vadd.f32 0.0, %v1610
    %1612 = vmatmul.f32.gmra.mxu0 %v1328
    %v1613 = vpop.f32.mrf.mxu0
    %v1614 = vadd.f32 0.0, %v1613
    %1615 = vdwg.mxu0
    %v1617 = vsel %vm39, %v1323, 0
    %1619 = vmatpush.xpose.msra.mxu0 0.0
    %1620 = vmatpush.xpose.msra.mxu0 0.0
    %1621 = vmatpush.xpose.msra.mxu0 0.0
    %1622 = vmatpush.xpose.msra.mxu0 0.0
    %1623 = vmatpush.xpose.msra.mxu0 0.0
    %1624 = vmatpush.xpose.msra.mxu0 0.0
    %1625 = vmatpush.xpose.msra.mxu0 0.0
    %1626 = vmatpush.xpose.msra.mxu0 0.0
    %1627 = vmatpush.xpose.msra.mxu0 0.0
    %1628 = vmatpush.xpose.msra.mxu0 0.0
    %1629 = vmatpush.xpose.msra.mxu0 0.0
    %1630 = vmatpush.xpose.msra.mxu0 0.0
    %1631 = vmatpush.xpose.msra.mxu0 0.0
    %1632 = vmatpush.xpose.msra.mxu0 0.0
    %1633 = vmatpush.xpose.msra.mxu0 0.0
    %1634 = vmatpush.xpose.msra.mxu0 %v1617
    %1635 = vmatmul.f32.gmra.mxu0 %v1325
    %v1636 = vpop.f32.mrf.mxu0
    %v1637 = vadd.f32 0.0, %v1636
    %1638 = vmatmul.f32.gmra.mxu0 %v1328
    %v1639 = vpop.f32.mrf.mxu0
    %v1640 = vadd.f32 0.0, %v1639
    %1641 = vdwg.mxu0
    %v1643 = vsel %vm459, %v1351, 0
    %v1646 = vsel %vm459, %v1354, 0
    %v1649 = vsel %vm459, %v1455, 0
    %v1652 = vsel %vm459, %v1458, 0
    %1654 = vmatpush.xpose.msra.mxu0 0.0
    %1655 = vmatpush.xpose.msra.mxu0 0.0
    %1656 = vmatpush.xpose.msra.mxu0 0.0
    %1657 = vmatpush.xpose.msra.mxu0 0.0
    %1658 = vmatpush.xpose.msra.mxu0 0.0
    %1659 = vmatpush.xpose.msra.mxu0 0.0
    %1660 = vmatpush.xpose.msra.mxu0 0.0
    %1661 = vmatpush.xpose.msra.mxu0 0.0
    %1662 = vmatpush.xpose.msra.mxu0 0.0
    %1663 = vmatpush.xpose.msra.mxu0 0.0
    %1664 = vmatpush.xpose.msra.mxu0 0.0
    %1665 = vmatpush.xpose.msra.mxu0 0.0
    %1666 = vmatpush.xpose.msra.mxu0 0.0
    %1667 = vmatpush.xpose.msra.mxu0 0.0
    %1668 = vmatpush.xpose.msra.mxu0 %v1652
    %1669 = vmatpush.xpose.msra.mxu0 %v1649
    %1670 = vmatmul.f32.gmra.mxu0 %v1643
    %v1671 = vpop.f32.mrf.mxu0
    %v1672 = vadd.f32 %v35, %v1671
    %1673 = vmatmul.f32.gmra.mxu0 %v1646
    %v1674 = vpop.f32.mrf.mxu0
    %v1675 = vadd.f32 %v36, %v1674
    %1676 = vdwg.mxu0
    %v1678 = vsel %vm459, %v1377, 0
    %v1681 = vsel %vm459, %v1380, 0
    %v1684 = vsel %vm459, %v1481, 0
    %v1687 = vsel %vm459, %v1484, 0
    %1689 = vmatpush.xpose.msra.mxu0 0.0
    %1690 = vmatpush.xpose.msra.mxu0 0.0
    %1691 = vmatpush.xpose.msra.mxu0 0.0
    %1692 = vmatpush.xpose.msra.mxu0 0.0
    %1693 = vmatpush.xpose.msra.mxu0 0.0
    %1694 = vmatpush.xpose.msra.mxu0 0.0
    %1695 = vmatpush.xpose.msra.mxu0 0.0
    %1696 = vmatpush.xpose.msra.mxu0 0.0
    %1697 = vmatpush.xpose.msra.mxu0 0.0
    %1698 = vmatpush.xpose.msra.mxu0 0.0
    %1699 = vmatpush.xpose.msra.mxu0 0.0
    %1700 = vmatpush.xpose.msra.mxu0 0.0
    %1701 = vmatpush.xpose.msra.mxu0 0.0
    %1702 = vmatpush.xpose.msra.mxu0 0.0
    %1703 = vmatpush.xpose.msra.mxu0 %v1687
    %1704 = vmatpush.xpose.msra.mxu0 %v1684
    %1705 = vmatmul.f32.gmra.mxu0 %v1678
    %v1706 = vpop.f32.mrf.mxu0
    %v1707 = vadd.f32 %v35, %v1706
    %1708 = vmatmul.f32.gmra.mxu0 %v1681
    %v1709 = vpop.f32.mrf.mxu0
    %v1710 = vadd.f32 %v36, %v1709
    %1711 = vdwg.mxu0
    %v1713 = vsel %vm459, %v1403, 0
    %v1716 = vsel %vm459, %v1406, 0
    %v1719 = vsel %vm459, %v1507, 0
    %v1722 = vsel %vm459, %v1510, 0
    %1724 = vmatpush.xpose.msra.mxu0 0.0
    %1725 = vmatpush.xpose.msra.mxu0 0.0
    %1726 = vmatpush.xpose.msra.mxu0 0.0
    %1727 = vmatpush.xpose.msra.mxu0 0.0
    %1728 = vmatpush.xpose.msra.mxu0 0.0
    %1729 = vmatpush.xpose.msra.mxu0 0.0
    %1730 = vmatpush.xpose.msra.mxu0 0.0
    %1731 = vmatpush.xpose.msra.mxu0 0.0
    %1732 = vmatpush.xpose.msra.mxu0 0.0
    %1733 = vmatpush.xpose.msra.mxu0 0.0
    %1734 = vmatpush.xpose.msra.mxu0 0.0
    %1735 = vmatpush.xpose.msra.mxu0 0.0
    %1736 = vmatpush.xpose.msra.mxu0 0.0
    %1737 = vmatpush.xpose.msra.mxu0 0.0
    %1738 = vmatpush.xpose.msra.mxu0 %v1722
    %1739 = vmatpush.xpose.msra.mxu0 %v1719
    %1740 = vmatmul.f32.gmra.mxu0 %v1713
    %v1741 = vpop.f32.mrf.mxu0
    %v1742 = vadd.f32 %v35, %v1741
    %1743 = vmatmul.f32.gmra.mxu0 %v1716
    %v1744 = vpop.f32.mrf.mxu0
    %v1745 = vadd.f32 %v36, %v1744
    %1746 = vdwg.mxu0
    %v1748 = vsel %vm459, %v1429, 0
    %v1751 = vsel %vm459, %v1432, 0
    %v1754 = vsel %vm459, %v1533, 0
    %v1757 = vsel %vm459, %v1536, 0
    %1759 = vmatpush.xpose.msra.mxu0 0.0
    %1760 = vmatpush.xpose.msra.mxu0 0.0
    %1761 = vmatpush.xpose.msra.mxu0 0.0
    %1762 = vmatpush.xpose.msra.mxu0 0.0
    %1763 = vmatpush.xpose.msra.mxu0 0.0
    %1764 = vmatpush.xpose.msra.mxu0 0.0
    %1765 = vmatpush.xpose.msra.mxu0 0.0
    %1766 = vmatpush.xpose.msra.mxu0 0.0
    %1767 = vmatpush.xpose.msra.mxu0 0.0
    %1768 = vmatpush.xpose.msra.mxu0 0.0
    %1769 = vmatpush.xpose.msra.mxu0 0.0
    %1770 = vmatpush.xpose.msra.mxu0 0.0
    %1771 = vmatpush.xpose.msra.mxu0 0.0
    %1772 = vmatpush.xpose.msra.mxu0 0.0
    %1773 = vmatpush.xpose.msra.mxu0 %v1757
    %1774 = vmatpush.xpose.msra.mxu0 %v1754
    %1775 = vmatmul.f32.gmra.mxu0 %v1748
    %v1776 = vpop.f32.mrf.mxu0
    %v1777 = vadd.f32 %v35, %v1776
    %1778 = vmatmul.f32.gmra.mxu0 %v1751
    %v1779 = vpop.f32.mrf.mxu0
    %v1780 = vadd.f32 %v36, %v1779
    %1781 = vdwg.mxu0
    %v1782 = vsel %vm600, %v1672, -inf
    %1783 = vmax.xlane.f32.xlu0 %v1782
    %v1784 = vpop.xlane.xlu0 %1783
    %v1785 = vsel %vm600, %v1675, -inf
    %1786 = vmax.xlane.f32.xlu0 %v1785
    %v1787 = vpop.xlane.xlu0 %1786
    %v1788 = vsel %vm600, %v1707, -inf
    %1789 = vmax.xlane.f32.xlu0 %v1788
    %v1790 = vpop.xlane.xlu0 %1789
    %v1791 = vsel %vm600, %v1710, -inf
    %1792 = vmax.xlane.f32.xlu0 %v1791
    %v1793 = vpop.xlane.xlu0 %1792
    %v1794 = vsel %vm600, %v1742, -inf
    %1795 = vmax.xlane.f32.xlu0 %v1794
    %v1796 = vpop.xlane.xlu0 %1795
    %v1797 = vsel %vm600, %v1745, -inf
    %1798 = vmax.xlane.f32.xlu0 %v1797
    %v1799 = vpop.xlane.xlu0 %1798
    %v1800 = vsel %vm600, %v1777, -inf
    %1801 = vmax.xlane.f32.xlu0 %v1800
    %v1802 = vpop.xlane.xlu0 %1801
    %v1803 = vsel %vm600, %v1780, -inf
    %1804 = vmax.xlane.f32.xlu0 %v1803
    %v1805 = vpop.xlane.xlu0 %1804
    %v1806 = vsub.f32 %v1672, %v1784
    %v1807 = vsub.f32 %v1675, %v1787
    %v1808 = vsub.f32 %v1707, %v1790
    %v1809 = vsub.f32 %v1710, %v1793
    %v1810 = vsub.f32 %v1742, %v1796
    %v1811 = vsub.f32 %v1745, %v1799
    %v1812 = vsub.f32 %v1777, %v1802
    %v1813 = vsub.f32 %v1780, %v1805
    %v1814 = vmul.f32 %v1806, 1.442695
    %v1815 = vpow.pop %v1814
    %v1816 = vmul.f32 %v1807, 1.442695
    %v1817 = vpow.pop %v1816
    %v1818 = vmul.f32 %v1808, 1.442695
    %v1819 = vpow.pop %v1818
    %v1820 = vmul.f32 %v1809, 1.442695
    %v1821 = vpow.pop %v1820
    %v1822 = vmul.f32 %v1810, 1.442695
    %v1823 = vpow.pop %v1822
    %v1824 = vmul.f32 %v1811, 1.442695
    %v1825 = vpow.pop %v1824
    %v1826 = vmul.f32 %v1812, 1.442695
    %v1827 = vpow.pop %v1826
    %v1828 = vmul.f32 %v1813, 1.442695
    %v1829 = vpow.pop %v1828
    %v1830 = vsel %vm600, %v1815, 0.0
    %1831 = vadd.xlane.f32.xlu0 %v1830
    %v1832 = vpop.xlane.xlu0 %1831
    %v1833 = vsel %vm600, %v1817, 0.0
    %1834 = vadd.xlane.f32.xlu0 %v1833
    %v1835 = vpop.xlane.xlu0 %1834
    %v1836 = vsel %vm600, %v1819, 0.0
    %1837 = vadd.xlane.f32.xlu0 %v1836
    %v1838 = vpop.xlane.xlu0 %1837
    %v1839 = vsel %vm600, %v1821, 0.0
    %1840 = vadd.xlane.f32.xlu0 %v1839
    %v1841 = vpop.xlane.xlu0 %1840
    %v1842 = vsel %vm600, %v1823, 0.0
    %1843 = vadd.xlane.f32.xlu0 %v1842
    %v1844 = vpop.xlane.xlu0 %1843
    %v1845 = vsel %vm600, %v1825, 0.0
    %1846 = vadd.xlane.f32.xlu0 %v1845
    %v1847 = vpop.xlane.xlu0 %1846
    %v1848 = vsel %vm600, %v1827, 0.0
    %1849 = vadd.xlane.f32.xlu0 %v1848
    %v1850 = vpop.xlane.xlu0 %1849
    %v1851 = vsel %vm600, %v1829, 0.0
    %1852 = vadd.xlane.f32.xlu0 %v1851
    %v1853 = vpop.xlane.xlu0 %1852
    %v1854 = vrcp.pop %v1832
    %v1855 = vmul.f32 %v1832, %v1854
    %v1856 = vsub.f32 1.0, %v1855
    %v1857 = vmul.f32 %v1854, %v1856
    %v1858 = vadd.f32 %v1854, %v1857
    %vm1859 = vweird.f32 %v1832
    %vm1860 = vweird.f32 %v1854
    %vm1861 = vmor %vm1859, %vm1860
    %v1862 = vsel %vm1861, %v1854, %v1858
    %v1863 = vand.u32 2147483647, %v1832
    %vm1864 = vcmp.eq.f32.partialorder %v1863, 8.507059e+37
    %v1865 = vand.u32 %v1832, 2147483648
    %v1866 = vor.u32 1.1754944e-38, %v1865
    %v1867 = vsel %vm1864, %v1866, %v1862
    %v1868 = vmul.f32 %v1815, %v1867
    %v1869 = vrcp.pop %v1835
    %v1870 = vmul.f32 %v1835, %v1869
    %v1871 = vsub.f32 1.0, %v1870
    %v1872 = vmul.f32 %v1869, %v1871
    %v1873 = vadd.f32 %v1869, %v1872
    %vm1874 = vweird.f32 %v1835
    %vm1875 = vweird.f32 %v1869
    %vm1876 = vmor %vm1874, %vm1875
    %v1877 = vsel %vm1876, %v1869, %v1873
    %v1878 = vand.u32 2147483647, %v1835
    %vm1879 = vcmp.eq.f32.partialorder %v1878, 8.507059e+37
    %v1880 = vand.u32 %v1835, 2147483648
    %v1881 = vor.u32 1.1754944e-38, %v1880
    %v1882 = vsel %vm1879, %v1881, %v1877
    %v1883 = vmul.f32 %v1817, %v1882
    %v1884 = vrcp.pop %v1838
    %v1885 = vmul.f32 %v1838, %v1884
    %v1886 = vsub.f32 1.0, %v1885
    %v1887 = vmul.f32 %v1884, %v1886
    %v1888 = vadd.f32 %v1884, %v1887
    %vm1889 = vweird.f32 %v1838
    %vm1890 = vweird.f32 %v1884
    %vm1891 = vmor %vm1889, %vm1890
    %v1892 = vsel %vm1891, %v1884, %v1888
    %v1893 = vand.u32 2147483647, %v1838
    %vm1894 = vcmp.eq.f32.partialorder %v1893, 8.507059e+37
    %v1895 = vand.u32 %v1838, 2147483648
    %v1896 = vor.u32 1.1754944e-38, %v1895
    %v1897 = vsel %vm1894, %v1896, %v1892
    %v1898 = vmul.f32 %v1819, %v1897
    %v1899 = vrcp.pop %v1841
    %v1900 = vmul.f32 %v1841, %v1899
    %v1901 = vsub.f32 1.0, %v1900
    %v1902 = vmul.f32 %v1899, %v1901
    %v1903 = vadd.f32 %v1899, %v1902
    %vm1904 = vweird.f32 %v1841
    %vm1905 = vweird.f32 %v1899
    %vm1906 = vmor %vm1904, %vm1905
    %v1907 = vsel %vm1906, %v1899, %v1903
    %v1908 = vand.u32 2147483647, %v1841
    %vm1909 = vcmp.eq.f32.partialorder %v1908, 8.507059e+37
    %v1910 = vand.u32 %v1841, 2147483648
    %v1911 = vor.u32 1.1754944e-38, %v1910
    %v1912 = vsel %vm1909, %v1911, %v1907
    %v1913 = vmul.f32 %v1821, %v1912
    %v1914 = vrcp.pop %v1844
    %v1915 = vmul.f32 %v1844, %v1914
    %v1916 = vsub.f32 1.0, %v1915
    %v1917 = vmul.f32 %v1914, %v1916
    %v1918 = vadd.f32 %v1914, %v1917
    %vm1919 = vweird.f32 %v1844
    %vm1920 = vweird.f32 %v1914
    %vm1921 = vmor %vm1919, %vm1920
    %v1922 = vsel %vm1921, %v1914, %v1918
    %v1923 = vand.u32 2147483647, %v1844
    %vm1924 = vcmp.eq.f32.partialorder %v1923, 8.507059e+37
    %v1925 = vand.u32 %v1844, 2147483648
    %v1926 = vor.u32 1.1754944e-38, %v1925
    %v1927 = vsel %vm1924, %v1926, %v1922
    %v1928 = vmul.f32 %v1823, %v1927
    %v1929 = vrcp.pop %v1847
    %v1930 = vmul.f32 %v1847, %v1929
    %v1931 = vsub.f32 1.0, %v1930
    %v1932 = vmul.f32 %v1929, %v1931
    %v1933 = vadd.f32 %v1929, %v1932
    %vm1934 = vweird.f32 %v1847
    %vm1935 = vweird.f32 %v1929
    %vm1936 = vmor %vm1934, %vm1935
    %v1937 = vsel %vm1936, %v1929, %v1933
    %v1938 = vand.u32 2147483647, %v1847
    %vm1939 = vcmp.eq.f32.partialorder %v1938, 8.507059e+37
    %v1940 = vand.u32 %v1847, 2147483648
    %v1941 = vor.u32 1.1754944e-38, %v1940
    %v1942 = vsel %vm1939, %v1941, %v1937
    %v1943 = vmul.f32 %v1825, %v1942
    %v1944 = vrcp.pop %v1850
    %v1945 = vmul.f32 %v1850, %v1944
    %v1946 = vsub.f32 1.0, %v1945
    %v1947 = vmul.f32 %v1944, %v1946
    %v1948 = vadd.f32 %v1944, %v1947
    %vm1949 = vweird.f32 %v1850
    %vm1950 = vweird.f32 %v1944
    %vm1951 = vmor %vm1949, %vm1950
    %v1952 = vsel %vm1951, %v1944, %v1948
    %v1953 = vand.u32 2147483647, %v1850
    %vm1954 = vcmp.eq.f32.partialorder %v1953, 8.507059e+37
    %v1955 = vand.u32 %v1850, 2147483648
    %v1956 = vor.u32 1.1754944e-38, %v1955
    %v1957 = vsel %vm1954, %v1956, %v1952
    %v1958 = vmul.f32 %v1827, %v1957
    %v1959 = vrcp.pop %v1853
    %v1960 = vmul.f32 %v1853, %v1959
    %v1961 = vsub.f32 1.0, %v1960
    %v1962 = vmul.f32 %v1959, %v1961
    %v1963 = vadd.f32 %v1959, %v1962
    %vm1964 = vweird.f32 %v1853
    %vm1965 = vweird.f32 %v1959
    %vm1966 = vmor %vm1964, %vm1965
    %v1967 = vsel %vm1966, %v1959, %v1963
    %v1968 = vand.u32 2147483647, %v1853
    %vm1969 = vcmp.eq.f32.partialorder %v1968, 8.507059e+37
    %v1970 = vand.u32 %v1853, 2147483648
    %v1971 = vor.u32 1.1754944e-38, %v1970
    %v1972 = vsel %vm1969, %v1971, %v1967
    %v1973 = vmul.f32 %v1829, %v1972
    %v1975 = vsel %vm600, %v1868, 0
    %v1978 = vsel %vm600, %v1883, 0
    %1980 = vmatpush.msra.mxu0 0.0
    %1981 = vmatpush.msra.mxu0 0.0
    %1982 = vmatpush.msra.mxu0 0.0
    %1983 = vmatpush.msra.mxu0 0.0
    %1984 = vmatpush.msra.mxu0 0.0
    %1985 = vmatpush.msra.mxu0 0.0
    %1986 = vmatpush.msra.mxu0 0.0
    %1987 = vmatpush.msra.mxu0 0.0
    %1988 = vmatpush.msra.mxu0 0.0
    %1989 = vmatpush.msra.mxu0 0.0
    %1990 = vmatpush.msra.mxu0 0.0
    %1991 = vmatpush.msra.mxu0 0.0
    %1992 = vmatpush.msra.mxu0 0.0
    %1993 = vmatpush.msra.mxu0 0.0
    %1994 = vmatpush.msra.mxu0 %v1562
    %1995 = vmatpush.msra.mxu0 %v1559
    %1996 = vmatmul.f32.gmra.mxu0 %v1975
    %v1997 = vpop.f32.mrf.mxu0
    %v1998 = vadd.f32 0.0, %v1997
    %1999 = vmatmul.f32.gmra.mxu0 %v1978
    %v2000 = vpop.f32.mrf.mxu0
    %v2001 = vadd.f32 0.0, %v2000
    %2002 = vdwg.mxu0
    %v2004 = vsel %vm600, %v1898, 0
    %v2007 = vsel %vm600, %v1913, 0
    %2009 = vmatpush.msra.mxu0 0.0
    %2010 = vmatpush.msra.mxu0 0.0
    %2011 = vmatpush.msra.mxu0 0.0
    %2012 = vmatpush.msra.mxu0 0.0
    %2013 = vmatpush.msra.mxu0 0.0
    %2014 = vmatpush.msra.mxu0 0.0
    %2015 = vmatpush.msra.mxu0 0.0
    %2016 = vmatpush.msra.mxu0 0.0
    %2017 = vmatpush.msra.mxu0 0.0
    %2018 = vmatpush.msra.mxu0 0.0
    %2019 = vmatpush.msra.mxu0 0.0
    %2020 = vmatpush.msra.mxu0 0.0
    %2021 = vmatpush.msra.mxu0 0.0
    %2022 = vmatpush.msra.mxu0 0.0
    %2023 = vmatpush.msra.mxu0 %v1588
    %2024 = vmatpush.msra.mxu0 %v1585
    %2025 = vmatmul.f32.gmra.mxu0 %v2004
    %v2026 = vpop.f32.mrf.mxu0
    %v2027 = vadd.f32 0.0, %v2026
    %2028 = vmatmul.f32.gmra.mxu0 %v2007
    %v2029 = vpop.f32.mrf.mxu0
    %v2030 = vadd.f32 0.0, %v2029
    %2031 = vdwg.mxu0
    %v2033 = vsel %vm600, %v1928, 0
    %v2036 = vsel %vm600, %v1943, 0
    %2038 = vmatpush.msra.mxu0 0.0
    %2039 = vmatpush.msra.mxu0 0.0
    %2040 = vmatpush.msra.mxu0 0.0
    %2041 = vmatpush.msra.mxu0 0.0
    %2042 = vmatpush.msra.mxu0 0.0
    %2043 = vmatpush.msra.mxu0 0.0
    %2044 = vmatpush.msra.mxu0 0.0
    %2045 = vmatpush.msra.mxu0 0.0
    %2046 = vmatpush.msra.mxu0 0.0
    %2047 = vmatpush.msra.mxu0 0.0
    %2048 = vmatpush.msra.mxu0 0.0
    %2049 = vmatpush.msra.mxu0 0.0
    %2050 = vmatpush.msra.mxu0 0.0
    %2051 = vmatpush.msra.mxu0 0.0
    %2052 = vmatpush.msra.mxu0 %v1614
    %2053 = vmatpush.msra.mxu0 %v1611
    %2054 = vmatmul.f32.gmra.mxu0 %v2033
    %v2055 = vpop.f32.mrf.mxu0
    %v2056 = vadd.f32 0.0, %v2055
    %2057 = vmatmul.f32.gmra.mxu0 %v2036
    %v2058 = vpop.f32.mrf.mxu0
    %v2059 = vadd.f32 0.0, %v2058
    %2060 = vdwg.mxu0
    %v2062 = vsel %vm600, %v1958, 0
    %v2065 = vsel %vm600, %v1973, 0
    %2067 = vmatpush.msra.mxu0 0.0
    %2068 = vmatpush.msra.mxu0 0.0
    %2069 = vmatpush.msra.mxu0 0.0
    %2070 = vmatpush.msra.mxu0 0.0
    %2071 = vmatpush.msra.mxu0 0.0
    %2072 = vmatpush.msra.mxu0 0.0
    %2073 = vmatpush.msra.mxu0 0.0
    %2074 = vmatpush.msra.mxu0 0.0
    %2075 = vmatpush.msra.mxu0 0.0
    %2076 = vmatpush.msra.mxu0 0.0
    %2077 = vmatpush.msra.mxu0 0.0
    %2078 = vmatpush.msra.mxu0 0.0
    %2079 = vmatpush.msra.mxu0 0.0
    %2080 = vmatpush.msra.mxu0 0.0
    %2081 = vmatpush.msra.mxu0 %v1640
    %2082 = vmatpush.msra.mxu0 %v1637
    %2083 = vmatmul.f32.gmra.mxu0 %v2062
    %v2084 = vpop.f32.mrf.mxu0
    %v2085 = vadd.f32 0.0, %v2084
    %2086 = vmatmul.f32.gmra.mxu0 %v2065
    %v2087 = vpop.f32.mrf.mxu0
    %v2088 = vadd.f32 0.0, %v2087
    %2089 = vdwg.mxu0
    %s2090 = scalar_lea.vmem %s3, 32
    %v2091 = vld [vmem:[%s2090] sm:$0xff]
    %v2092 = vld [vmem:[%s2090 + $0x8] sm:$0xff]
    %v2093 = vld [vmem:[%s2090 + $0x10] sm:$0xff]
    %v2094 = vld [vmem:[%s2090 + $0x18] sm:$0xff]
    %v2096 = vsel %vm459, %v1998, 0
    %v2099 = vsel %vm459, %v2001, 0
    %2101 = vmatpush.msra.mxu0 0.0
    %2102 = vmatpush.msra.mxu0 0.0
    %2103 = vmatpush.msra.mxu0 0.0
    %2104 = vmatpush.msra.mxu0 0.0
    %2105 = vmatpush.msra.mxu0 0.0
    %2106 = vmatpush.msra.mxu0 0.0
    %2107 = vmatpush.msra.mxu0 0.0
    %2108 = vmatpush.msra.mxu0 0.0
    %2109 = vmatpush.msra.mxu0 0.0
    %2110 = vmatpush.msra.mxu0 0.0
    %2111 = vmatpush.msra.mxu0 0.0
    %2112 = vmatpush.msra.mxu0 0.0
    %2113 = vmatpush.msra.mxu0 0.0
    %2114 = vmatpush.msra.mxu0 0.0
    %2115 = vmatpush.msra.mxu0 0.0
    %2116 = vmatpush.msra.mxu0 %v2091
    %2117 = vmatmul.f32.gmra.mxu0 %v2096
    %v2118 = vpop.f32.mrf.mxu0
    %v2119 = vadd.f32 0.0, %v2118
    %2120 = vmatmul.f32.gmra.mxu0 %v2099
    %v2121 = vpop.f32.mrf.mxu0
    %v2122 = vadd.f32 0.0, %v2121
    %2123 = vdwg.mxu0
    %v2125 = vsel %vm459, %v2027, 0
    %v2128 = vsel %vm459, %v2030, 0
    %2130 = vmatpush.msra.mxu0 0.0
    %2131 = vmatpush.msra.mxu0 0.0
    %2132 = vmatpush.msra.mxu0 0.0
    %2133 = vmatpush.msra.mxu0 0.0
    %2134 = vmatpush.msra.mxu0 0.0
    %2135 = vmatpush.msra.mxu0 0.0
    %2136 = vmatpush.msra.mxu0 0.0
    %2137 = vmatpush.msra.mxu0 0.0
    %2138 = vmatpush.msra.mxu0 0.0
    %2139 = vmatpush.msra.mxu0 0.0
    %2140 = vmatpush.msra.mxu0 0.0
    %2141 = vmatpush.msra.mxu0 0.0
    %2142 = vmatpush.msra.mxu0 0.0
    %2143 = vmatpush.msra.mxu0 0.0
    %2144 = vmatpush.msra.mxu0 0.0
    %2145 = vmatpush.msra.mxu0 %v2092
    %2146 = vmatmul.f32.gmra.mxu0 %v2125
    %v2147 = vpop.f32.mrf.mxu0
    %v2148 = vadd.f32 0.0, %v2147
    %2149 = vmatmul.f32.gmra.mxu0 %v2128
    %v2150 = vpop.f32.mrf.mxu0
    %v2151 = vadd.f32 0.0, %v2150
    %2152 = vdwg.mxu0
    %v2154 = vsel %vm459, %v2056, 0
    %v2157 = vsel %vm459, %v2059, 0
    %2159 = vmatpush.msra.mxu0 0.0
    %2160 = vmatpush.msra.mxu0 0.0
    %2161 = vmatpush.msra.mxu0 0.0
    %2162 = vmatpush.msra.mxu0 0.0
    %2163 = vmatpush.msra.mxu0 0.0
    %2164 = vmatpush.msra.mxu0 0.0
    %2165 = vmatpush.msra.mxu0 0.0
    %2166 = vmatpush.msra.mxu0 0.0
    %2167 = vmatpush.msra.mxu0 0.0
    %2168 = vmatpush.msra.mxu0 0.0
    %2169 = vmatpush.msra.mxu0 0.0
    %2170 = vmatpush.msra.mxu0 0.0
    %2171 = vmatpush.msra.mxu0 0.0
    %2172 = vmatpush.msra.mxu0 0.0
    %2173 = vmatpush.msra.mxu0 0.0
    %2174 = vmatpush.msra.mxu0 %v2093
    %2175 = vmatmul.f32.gmra.mxu0 %v2154
    %v2176 = vpop.f32.mrf.mxu0
    %v2177 = vadd.f32 0.0, %v2176
    %2178 = vmatmul.f32.gmra.mxu0 %v2157
    %v2179 = vpop.f32.mrf.mxu0
    %v2180 = vadd.f32 0.0, %v2179
    %2181 = vdwg.mxu0
    %v2183 = vsel %vm459, %v2085, 0
    %v2186 = vsel %vm459, %v2088, 0
    %2188 = vmatpush.msra.mxu0 0.0
    %2189 = vmatpush.msra.mxu0 0.0
    %2190 = vmatpush.msra.mxu0 0.0
    %2191 = vmatpush.msra.mxu0 0.0
    %2192 = vmatpush.msra.mxu0 0.0
    %2193 = vmatpush.msra.mxu0 0.0
    %2194 = vmatpush.msra.mxu0 0.0
    %2195 = vmatpush.msra.mxu0 0.0
    %2196 = vmatpush.msra.mxu0 0.0
    %2197 = vmatpush.msra.mxu0 0.0
    %2198 = vmatpush.msra.mxu0 0.0
    %2199 = vmatpush.msra.mxu0 0.0
    %2200 = vmatpush.msra.mxu0 0.0
    %2201 = vmatpush.msra.mxu0 0.0
    %2202 = vmatpush.msra.mxu0 0.0
    %2203 = vmatpush.msra.mxu0 %v2094
    %2204 = vmatmul.f32.gmra.mxu0 %v2183
    %v2205 = vpop.f32.mrf.mxu0
    %v2206 = vadd.f32 0.0, %v2205
    %2207 = vmatmul.f32.gmra.mxu0 %v2186
    %v2208 = vpop.f32.mrf.mxu0
    %v2209 = vadd.f32 0.0, %v2208
    %2210 = vdwg.mxu0
    %v2211 = vsel %vm39, %v2119, 0.0
    %v2212 = vsel %vm39, %v2148, 0.0
    %v2213 = vadd.f32 %v2211, %v2212
    %v2214 = vsel %vm39, %v2177, 0.0
    %v2215 = vadd.f32 %v2213, %v2214
    %v2216 = vsel %vm39, %v2206, 0.0
    %v2217 = vadd.f32 %v2215, %v2216
    %v2218 = vsel %vm39, %v2122, 0.0
    %v2219 = vsel %vm39, %v2151, 0.0
    %v2220 = vadd.f32 %v2218, %v2219
    %v2221 = vsel %vm39, %v2180, 0.0
    %v2222 = vadd.f32 %v2220, %v2221
    %v2223 = vsel %vm39, %v2209, 0.0
    %v2224 = vadd.f32 %v2222, %v2223
    %v2225 = vperm.slane %v1226, 2
    %v2226 = vadd.f32 %v2217, %v2225
    %v2227 = vadd.f32 %v2224, %v2225
    %v2228 = vadd.f32 %v1223, %v2226
    %v2229 = vadd.f32 %v1224, %v2227
    %v2230 = vsel %vm39, %v2228, 0.0
    %2231 = vadd.xlane.f32.xlu0 %v2230
    %v2232 = vpop.xlane.xlu0 %2231
    %v2233 = vsel %vm39, %v2229, 0.0
    %2234 = vadd.xlane.f32.xlu0 %v2233
    %v2235 = vpop.xlane.xlu0 %2234
    %v2236 = vmul.f32 %v2232, %v52
    %v2237 = vmul.f32 %v2235, %v52
    %v2238 = vsub.f32 %v2228, %v2236
    %v2239 = vsub.f32 %v2229, %v2237
    %v2240 = vmul.f32 %v2238, %v2238
    %v2241 = vmul.f32 %v2239, %v2239
    %v2242 = vsel %vm39, %v2240, 0.0
    %2243 = vadd.xlane.f32.xlu0 %v2242
    %v2244 = vpop.xlane.xlu0 %2243
    %v2245 = vsel %vm39, %v2241, 0.0
    %2246 = vadd.xlane.f32.xlu0 %v2245
    %v2247 = vpop.xlane.xlu0 %2246
    %v2248 = vmul.f32 %v2244, %v52
    %v2249 = vmul.f32 %v2247, %v52
    %v2250 = vrsqrt.pop %v2248
    %v2251 = vmul.f32 %v2250, %v2248
    %v2252 = vmul.f32 %v2251, %v2250
    %v2253 = vmul.f32 0.5, %v2252
    %v2254 = vsub.f32 1.5, %v2253
    %v2255 = vmul.f32 %v2250, %v2254
    %v2256 = vmul.f32 %v2248, %v2255
    %vm2257 = vcmp.eq.f32.partialorder %v2248, inf
    %v2258 = vsel %vm2257, %v2248, %v2256
    %vm2259 = vcmp.eq.f32.partialorder %v2248, 0.0
    %v2260 = vand.u32 %v2248, 2147483648
    %v2261 = vsel %vm2259, %v2260, %v2258
    %v2262 = vrsqrt.pop %v2249
    %v2263 = vmul.f32 %v2262, %v2249
    %v2264 = vmul.f32 %v2263, %v2262
    %v2265 = vmul.f32 0.5, %v2264
    %v2266 = vsub.f32 1.5, %v2265
    %v2267 = vmul.f32 %v2262, %v2266
    %v2268 = vmul.f32 %v2249, %v2267
    %vm2269 = vcmp.eq.f32.partialorder %v2249, inf
    %v2270 = vsel %vm2269, %v2249, %v2268
    %vm2271 = vcmp.eq.f32.partialorder %v2249, 0.0
    %v2272 = vand.u32 %v2249, 2147483648
    %v2273 = vsel %vm2271, %v2272, %v2270
    %v2274 = vadd.f32 %v2261, 1e-05
    %v2275 = vadd.f32 %v2273, 1e-05
    %v2276 = vrcp.pop %v2274
    %v2277 = vmul.f32 %v2274, %v2276
    %v2278 = vsub.f32 1.0, %v2277
    %v2279 = vmul.f32 %v2276, %v2278
    %v2280 = vadd.f32 %v2276, %v2279
    %vm2281 = vweird.f32 %v2274
    %vm2282 = vweird.f32 %v2276
    %vm2283 = vmor %vm2281, %vm2282
    %v2284 = vsel %vm2283, %v2276, %v2280
    %v2285 = vand.u32 2147483647, %v2274
    %vm2286 = vcmp.eq.f32.partialorder %v2285, 8.507059e+37
    %v2287 = vand.u32 %v2274, 2147483648
    %v2288 = vor.u32 1.1754944e-38, %v2287
    %v2289 = vsel %vm2286, %v2288, %v2284
    %v2290 = vmul.f32 %v2238, %v2289
    %v2291 = vrcp.pop %v2275
    %v2292 = vmul.f32 %v2275, %v2291
    %v2293 = vsub.f32 1.0, %v2292
    %v2294 = vmul.f32 %v2291, %v2293
    %v2295 = vadd.f32 %v2291, %v2294
    %vm2296 = vweird.f32 %v2275
    %vm2297 = vweird.f32 %v2291
    %vm2298 = vmor %vm2296, %vm2297
    %v2299 = vsel %vm2298, %v2291, %v2295
    %v2300 = vand.u32 2147483647, %v2275
    %vm2301 = vcmp.eq.f32.partialorder %v2300, 8.507059e+37
    %v2302 = vand.u32 %v2275, 2147483648
    %v2303 = vor.u32 1.1754944e-38, %v2302
    %v2304 = vsel %vm2301, %v2303, %v2299
    %v2305 = vmul.f32 %v2239, %v2304
    %v2306 = vperm.slane %v1226, 3
    %v2307 = vmul.f32 %v2290, %v2306
    %v2308 = vmul.f32 %v2305, %v2306
    %v2309 = vperm.slane %v1226, 4
    %v2310 = vadd.f32 %v2307, %v2309
    %v2311 = vadd.f32 %v2308, %v2309
    %s2312 = scalar_lea.vmem %s4, 32
    %v2313 = vld [vmem:[%s2312] sm:$0xff]
    %v2314 = vld [vmem:[%s2312 + $0x8] sm:$0xff]
    %v2315 = vld [vmem:[%s2312 + $0x10] sm:$0xff]
    %v2316 = vld [vmem:[%s2312 + $0x18] sm:$0xff]
    %v2318 = vperm.slane %v1228, 0
    %v2321 = vsel %vm39, %v2310, 0
    %v2324 = vsel %vm39, %v2311, 0
    %2326 = vmatpush.msra.mxu0 0.0
    %2327 = vmatpush.msra.mxu0 0.0
    %2328 = vmatpush.msra.mxu0 0.0
    %2329 = vmatpush.msra.mxu0 0.0
    %2330 = vmatpush.msra.mxu0 0.0
    %2331 = vmatpush.msra.mxu0 0.0
    %2332 = vmatpush.msra.mxu0 0.0
    %2333 = vmatpush.msra.mxu0 0.0
    %2334 = vmatpush.msra.mxu0 0.0
    %2335 = vmatpush.msra.mxu0 0.0
    %2336 = vmatpush.msra.mxu0 0.0
    %2337 = vmatpush.msra.mxu0 0.0
    %2338 = vmatpush.msra.mxu0 %v2316
    %2339 = vmatpush.msra.mxu0 %v2315
    %2340 = vmatpush.msra.mxu0 %v2314
    %2341 = vmatpush.msra.mxu0 %v2313
    %2342 = vmatmul.f32.gmra.mxu0 %v2321
    %v2343 = vpop.f32.mrf.mxu0
    %v2344 = vadd.f32 %v2318, %v2343
    %2345 = vmatmul.f32.gmra.mxu0 %v2324
    %v2346 = vpop.f32.mrf.mxu0
    %v2347 = vadd.f32 %v2318, %v2346
    %2348 = vdwg.mxu0
    %v2349 = vmul.f32 %v2344, 0.5
    %v2350 = vmul.f32 %v2347, 0.5
    %v2351 = vmul.f32 %v2344, 0.044715
    %v2352 = vmul.f32 %v2347, 0.044715
    %v2353 = vmul.f32 %v2351, %v2344
    %v2354 = vmul.f32 %v2352, %v2347
    %v2355 = vmul.f32 %v2353, %v2344
    %v2356 = vmul.f32 %v2354, %v2347
    %v2357 = vadd.f32 %v2344, %v2355
    %v2358 = vadd.f32 %v2347, %v2356
    %v2359 = vmul.f32 %v2357, 0.797885
    %v2360 = vmul.f32 %v2358, 0.797885
    %v2361 = vtanh.pop %v2359
    %v2362 = vtanh.pop %v2360
    %v2363 = vadd.f32 %v2361, 1.0
    %v2364 = vadd.f32 %v2362, 1.0
    %v2365 = vmul.f32 %v2349, %v2363
    %v2366 = vmul.f32 %v2350, %v2364
    %s2367 = scalar_lea.vmem %s5, 64
    %v2368 = vld [vmem:[%s2367] sm:$0xff]
    %v2369 = vld [vmem:[%s2367 + $0x8] sm:$0xff]
    %v2370 = vld [vmem:[%s2367 + $0x10] sm:$0xff]
    %v2371 = vld [vmem:[%s2367 + $0x18] sm:$0xff]
    %v2372 = vld [vmem:[%s2367 + $0x20] sm:$0xff]
    %v2373 = vld [vmem:[%s2367 + $0x28] sm:$0xff]
    %v2374 = vld [vmem:[%s2367 + $0x30] sm:$0xff]
    %v2375 = vld [vmem:[%s2367 + $0x38] sm:$0xff]
    %v2376 = vperm.slane %v1226, 5
    %v2378 = vsel %vm1193, %v2365, 0
    %v2381 = vsel %vm1193, %v2366, 0
    %2383 = vmatpush.msra.mxu0 0.0
    %2384 = vmatpush.msra.mxu0 0.0
    %2385 = vmatpush.msra.mxu0 0.0
    %2386 = vmatpush.msra.mxu0 0.0
    %2387 = vmatpush.msra.mxu0 0.0
    %2388 = vmatpush.msra.mxu0 0.0
    %2389 = vmatpush.msra.mxu0 0.0
    %2390 = vmatpush.msra.mxu0 0.0
    %2391 = vmatpush.msra.mxu0 %v2375
    %2392 = vmatpush.msra.mxu0 %v2374
    %2393 = vmatpush.msra.mxu0 %v2373
    %2394 = vmatpush.msra.mxu0 %v2372
    %2395 = vmatpush.msra.mxu0 %v2371
    %2396 = vmatpush.msra.mxu0 %v2370
    %2397 = vmatpush.msra.mxu0 %v2369
    %2398 = vmatpush.msra.mxu0 %v2368
    %2399 = vmatmul.f32.gmra.mxu0 %v2378
    %v2400 = vpop.f32.mrf.mxu0
    %v2401 = vadd.f32 %v2376, %v2400
    %2402 = vmatmul.f32.gmra.mxu0 %v2381
    %v2403 = vpop.f32.mrf.mxu0
    %v2404 = vadd.f32 %v2376, %v2403
    %2405 = vdwg.mxu0
    %v2406 = vadd.f32 %v2228, %v2401
    %v2407 = vadd.f32 %v2229, %v2404
    %v2408 = vsel %vm39, %v2406, 0.0
    %2409 = vadd.xlane.f32.xlu0 %v2408
    %v2410 = vpop.xlane.xlu0 %2409
    %v2411 = vsel %vm39, %v2407, 0.0
    %2412 = vadd.xlane.f32.xlu0 %v2411
    %v2413 = vpop.xlane.xlu0 %2412
    %v2414 = vmul.f32 %v2410, %v52
    %v2415 = vmul.f32 %v2413, %v52
    %v2416 = vsub.f32 %v2406, %v2414
    %v2417 = vsub.f32 %v2407, %v2415
    %v2418 = vmul.f32 %v2416, %v2416
    %v2419 = vmul.f32 %v2417, %v2417
    %v2420 = vsel %vm39, %v2418, 0.0
    %2421 = vadd.xlane.f32.xlu0 %v2420
    %v2422 = vpop.xlane.xlu0 %2421
    %v2423 = vsel %vm39, %v2419, 0.0
    %2424 = vadd.xlane.f32.xlu0 %v2423
    %v2425 = vpop.xlane.xlu0 %2424
    %v2426 = vmul.f32 %v2422, %v52
    %v2427 = vmul.f32 %v2425, %v52
    %v2428 = vadd.f32 %v2426, 1e-05
    %v2429 = vadd.f32 %v2427, 1e-05
    %v2430 = vrsqrt.pop %v2428
    %v2431 = vmul.f32 %v2430, %v2428
    %v2432 = vmul.f32 %v2431, %v2430
    %v2433 = vmul.f32 0.5, %v2432
    %v2434 = vsub.f32 1.5, %v2433
    %v2435 = vmul.f32 %v2430, %v2434
    %v2436 = vmul.f32 %v2428, %v2435
    %vm2437 = vcmp.eq.f32.partialorder %v2428, inf
    %v2438 = vsel %vm2437, %v2428, %v2436
    %vm2439 = vcmp.eq.f32.partialorder %v2428, 0.0
    %v2440 = vand.u32 %v2428, 2147483648
    %v2441 = vsel %vm2439, %v2440, %v2438
    %v2442 = vrsqrt.pop %v2429
    %v2443 = vmul.f32 %v2442, %v2429
    %v2444 = vmul.f32 %v2443, %v2442
    %v2445 = vmul.f32 0.5, %v2444
    %v2446 = vsub.f32 1.5, %v2445
    %v2447 = vmul.f32 %v2442, %v2446
    %v2448 = vmul.f32 %v2429, %v2447
    %vm2449 = vcmp.eq.f32.partialorder %v2429, inf
    %v2450 = vsel %vm2449, %v2429, %v2448
    %vm2451 = vcmp.eq.f32.partialorder %v2429, 0.0
    %v2452 = vand.u32 %v2429, 2147483648
    %v2453 = vsel %vm2451, %v2452, %v2450
    %v2454 = vrcp.pop %v2441
    %v2455 = vmul.f32 %v2441, %v2454
    %v2456 = vsub.f32 1.0, %v2455
    %v2457 = vmul.f32 %v2454, %v2456
    %v2458 = vadd.f32 %v2454, %v2457
    %vm2459 = vweird.f32 %v2441
    %vm2460 = vweird.f32 %v2454
    %vm2461 = vmor %vm2459, %vm2460
    %v2462 = vsel %vm2461, %v2454, %v2458
    %v2463 = vand.u32 2147483647, %v2441
    %vm2464 = vcmp.eq.f32.partialorder %v2463, 8.507059e+37
    %v2465 = vand.u32 %v2441, 2147483648
    %v2466 = vor.u32 1.1754944e-38, %v2465
    %v2467 = vsel %vm2464, %v2466, %v2462
    %v2468 = vmul.f32 %v2416, %v2467
    %v2469 = vrcp.pop %v2453
    %v2470 = vmul.f32 %v2453, %v2469
    %v2471 = vsub.f32 1.0, %v2470
    %v2472 = vmul.f32 %v2469, %v2471
    %v2473 = vadd.f32 %v2469, %v2472
    %vm2474 = vweird.f32 %v2453
    %vm2475 = vweird.f32 %v2469
    %vm2476 = vmor %vm2474, %vm2475
    %v2477 = vsel %vm2476, %v2469, %v2473
    %v2478 = vand.u32 2147483647, %v2453
    %vm2479 = vcmp.eq.f32.partialorder %v2478, 8.507059e+37
    %v2480 = vand.u32 %v2453, 2147483648
    %v2481 = vor.u32 1.1754944e-38, %v2480
    %v2482 = vsel %vm2479, %v2481, %v2477
    %v2483 = vmul.f32 %v2417, %v2482
    %v2484 = vld [vmem:[%s8] sm:$0x1]
    %v2485 = vperm.slane %v2484, 0
    %v2486 = vmul.f32 %v2468, %v2485
    %v2487 = vmul.f32 %v2483, %v2485
    %v2488 = vld [vmem:[%s8 + $0x1] sm:$0x1]
    %v2489 = vperm.slane %v2488, 0
    %v2490 = vadd.f32 %v2486, %v2489
    %v2491 = vadd.f32 %v2487, %v2489
    %2492 = vst.msk [vmem:[#allocation2] sm:$0xff] %vm39, %v2490
    %2493 = vst.msk [vmem:[#allocation2 + $0x8] sm:$0xff] %vm39, %v2491
    // Predicated region
    $region38: #{gptneo_forward.1} parent=1 // pred_check
      _
    $region39: #{gptneo_forward.1} parent=1 // pred_check_branch
      %2495 = sbr.rel (0) target = $region41
    $region40: #{gptneo_forward.1} parent=1 // pred_region
      %2497 = vsyncadd [#allocation3], 0
      %s2498 = sshll.u32 [#allocation2], 4
      %s2499 = int_to_ptr.vmem [resolvable:$true] %s2498
      %s2500 = sshll.u32 %s9, 4
      %s2501 = int_to_ptr.hbm [resolvable:$true] %s2500
      %2506 = dma.vmem_to_hbm [thread:$0]  %s2499, 256, %s2501, [#allocation3], 128, 128, 8
    $region41: #{gptneo_forward.1} parent=1 // pred_fallthru
      _
    // Predicated region
    $region42: #{gptneo_forward.1} parent=1 // pred_check
      _
    $region43: #{gptneo_forward.1} parent=1 // pred_check_branch
      %2508 = sbr.rel (0) target = $region45
    $region44: #{gptneo_forward.1} parent=1 // pred_region
      %2510 = dma.done [#allocation3], 256
    $region45: #{gptneo_forward.1} parent=1 // pred_fallthru
      _
    %2511 = vsyncpa [#allocation3], 1

</llo_original>
